<compile_context>
chip_gen: v7x
topology: tpu7x:2x2x1
jax: 0.10.0
libtpu: 0.0.40
codegen_flags: <defaults>
</compile_context>

<pallas_src>
import jax
import jax.numpy as jnp
from jax.experimental import pallas as pl
from jax.experimental.pallas import tpu as pltpu


N_PAD = 128      # lane-aligned atoms per action (real atoms live in [:atom_size])
OUT_PAD = 128    # lane-dense width of the q output slab


def _round_up(x: int, m: int) -> int:
    return ((x + m - 1) // m) * m


def make_dqn_kernel(action_size: int, compute_dtype):
    """Kernel closure with static (action_size, matmul compute dtype)."""

    def kernel(x_ref, w1_ref, b1_ref, w2_ref, b2_ref, w3_ref, b3_ref,
               sup_sel_ref, one_sel_ref, q_ref):
        cd = compute_dtype
        x = x_ref[...].astype(cd)                                    # [TB, S]

        # --- MLP trunk on the MXU (f32 accumulation, f32 elementwise) -------
        h1 = jnp.dot(x, w1_ref[...], preferred_element_type=jnp.float32)
        h1 = jnp.maximum(h1 + b1_ref[...], 0.0)                      # [TB, 128]
        h2 = jnp.dot(h1.astype(cd), w2_ref[...],
                     preferred_element_type=jnp.float32)
        h2 = jnp.maximum(h2 + b2_ref[...], 0.0)                      # [TB, 128]
        h2c = h2.astype(cd)

        # --- fused layer-3 + per-action softmax (static unroll over A) ------
        # Each action is a lane-aligned 128-wide slice: unmasked XLU reduces,
        # no 3-D relayout, and the full [TB, A*128] logits are never stored.
        e_parts = []
        u_parts = []
        for a in range(action_size):
            w3a = w3_ref[:, a * N_PAD:(a + 1) * N_PAD]               # [128, 128]
            b3a = b3_ref[:, a * N_PAD:(a + 1) * N_PAD]               # [1, 128]
            la = jnp.dot(h2c, w3a,
                         preferred_element_type=jnp.float32) + b3a   # [TB, 128]
            m = jnp.max(la, axis=-1, keepdims=True)
            e = jnp.exp(la - m)                 # padded lanes: exp(-huge) == 0
            s = jnp.sum(e, axis=-1, keepdims=True)                   # s >= 1
            e_parts.append(e)
            # max(e, 0.001*s) == s * clamp(softmax, 0.001); the 1/s scale is
            # deferred until after the MXU reduction (one per output column).
            u_parts.append(jnp.maximum(e, 0.001 * s))
        e_full = jnp.concatenate(e_parts, axis=-1)                   # [TB, A*128]
        u_full = jnp.concatenate(u_parts, axis=-1)                   # [TB, A*128]

        # --- support-weighted sum + action placement on the MXU --------------
        # sup_sel[a*128+n, a] = support[n]  (zeros elsewhere)
        # one_sel[a*128+n, a] = 1           (zeros elsewhere)
        numer = jnp.dot(u_full, sup_sel_ref[...],
                        preferred_element_type=jnp.float32)          # [TB, 128]
        denom = jnp.dot(e_full, one_sel_ref[...],
                        preferred_element_type=jnp.float32)          # [TB, 128]
        # Real columns have denom = s >= 1; padded columns are exactly 0 and
        # are clamped so the approx reciprocal stays finite (numer there is 0).
        q = numer * pl.reciprocal(jnp.maximum(denom, 0.5), approx=True)

        q_ref[...] = q.astype(q_ref.dtype)                           # lane-dense store

    return kernel


def dqn_forward(x, params, support, action_size: int, atom_size: int, *,
                max_block_b: int = 1024, compute_dtype=jnp.bfloat16):
    """x: [B, S] float32; returns q: [B, A] float32."""
    w1, b1, w2, b2, w3, b3 = params
    B, S = x.shape
    H1 = w1.shape[1]
    H2 = w2.shape[1]
    assert atom_size <= N_PAD and action_size <= OUT_PAD

    # --- pad layer 3 to 128 atoms / action (inert padding) ------------------
    w3p = jnp.zeros((H2, action_size, N_PAD), w3.dtype)
    w3p = w3p.at[:, :, :atom_size].set(w3.reshape(H2, action_size, atom_size))
    w3p = w3p.reshape(H2, action_size * N_PAD)
    b3p = jnp.full((action_size, N_PAD), -1e30, jnp.float32)   # stays f32
    b3p = b3p.at[:, :atom_size].set(b3.reshape(action_size, atom_size))
    b3p = b3p.reshape(1, action_size * N_PAD)

    # --- block-diagonal selector matrices for the MXU reduction --------------
    sup = support.reshape(atom_size).astype(jnp.float32)
    sup_sel = jnp.zeros((action_size * N_PAD, OUT_PAD), jnp.float32)
    one_sel = jnp.zeros((action_size * N_PAD, OUT_PAD), jnp.float32)
    for a in range(action_size):
        sup_sel = sup_sel.at[a * N_PAD:a * N_PAD + atom_size, a].set(sup)
        one_sel = one_sel.at[a * N_PAD:a * N_PAD + atom_size, a].set(1.0)

    # --- matmul operands in bf16 (biases / selectors / softmax stay f32) -----
    w1c = w1.astype(compute_dtype)
    w2c = w2.astype(compute_dtype)
    w3c = w3p.astype(compute_dtype)

    # --- batch tiling ---------------------------------------------------------
    # Few, large steps (amortize per-step overhead on single-TC v5e/v6e) but
    # at least 2 steps when B > 8 so v7x megacore gets both TensorCores busy.
    if B <= 8:
        TB = _round_up(B, 8)
    else:
        TB = min(_round_up(-(-B // 2), 8), max_block_b)
    Bp = _round_up(B, TB)
    if Bp != B:
        x = jnp.pad(x, ((0, Bp - B), (0, 0)))
    grid = (Bp // TB,)

    def const2d(arr):
        return pl.BlockSpec(arr.shape, lambda i: (0, 0))

    wbytes = jnp.dtype(compute_dtype).itemsize
    AN = action_size * N_PAD
    cost = pl.CostEstimate(
        flops=2 * Bp * (S * H1 + H1 * H2 + H2 * AN + 2 * AN * OUT_PAD),
        transcendentals=Bp * (AN + OUT_PAD),
        bytes_accessed=(Bp * S * 4 + Bp * OUT_PAD * 4
                        + (w1c.size + w2c.size + w3c.size) * wbytes
                        + (b1.size + b2.size + b3p.size
                           + sup_sel.size + one_sel.size) * 4),
    )

    kernel = make_dqn_kernel(action_size, compute_dtype)
    q_pad = pl.pallas_call(
        kernel,
        out_shape=jax.ShapeDtypeStruct((Bp, OUT_PAD), jnp.float32),
        grid=grid,
        in_specs=[
            pl.BlockSpec((TB, S), lambda i: (i, 0)),     # x: tiled over batch
            const2d(w1c), const2d(b1),
            const2d(w2c), const2d(b2),
            const2d(w3c), const2d(b3p),
            const2d(sup_sel), const2d(one_sel),
        ],
        out_specs=pl.BlockSpec((TB, OUT_PAD), lambda i: (i, 0)),
        compiler_params=pltpu.CompilerParams(dimension_semantics=("parallel",)),
        cost_estimate=cost,
    )(x, w1c, b1, w2c, b2, w3c, b3p, sup_sel, one_sel)

    return q_pad[:B, :action_size]


def init_params(key, state_size: int, action_size: int, atom_size: int):
    """Deterministic PyTorch-style (uniform fan-in) init; weights stored [in, out]."""
    dims = [(state_size, 128), (128, 128), (128, action_size * atom_size)]
    params = []
    for (fan_in, fan_out) in dims:
        key, kw, kb = jax.random.split(key, 3)
        bound = 1.0 / (fan_in ** 0.5)
        w = jax.random.uniform(kw, (fan_in, fan_out), jnp.float32, -bound, bound)
        b = jax.random.uniform(kb, (1, fan_out), jnp.float32, -bound, bound)
        params += [w, b]
    return tuple(params)


def reference_forward(x, params, support, action_size, atom_size,
                      matmul_dtype=jnp.float32):
    """Plain-JAX reference matching the PyTorch module; optionally applies the
    same bf16 matmul-operand cast the kernel uses (f32 accumulation)."""
    w1, b1, w2, b2, w3, b3 = params
    cd = matmul_dtype
    dot = lambda a, b: jnp.dot(a.astype(cd), b.astype(cd),
                               preferred_element_type=jnp.float32)
    h1 = jnp.maximum(dot(x, w1) + b1, 0.0)
    h2 = jnp.maximum(dot(h1, w2) + b2, 0.0)
    logits = (dot(h2, w3) + b3).reshape(-1, action_size, atom_size)
    dist = jax.nn.softmax(logits, axis=-1)
    dist = jnp.maximum(dist, 0.001)          # clamp(min=0.001); no renormalize
    return jnp.sum(dist * support.reshape(1, 1, atom_size), axis=2)


if __name__ == "__main__":
    # Small, module-consistent shapes.
    batch = 2
    state_size = 16
    action_size = 4
    atom_size = 51           # classic C51
    v_min, v_max = -10.0, 10.0

    key = jax.random.PRNGKey(0)
    key, kx = jax.random.split(key)
    x = jax.random.normal(kx, (batch, state_size), jnp.float32)

    params = init_params(key, state_size, action_size, atom_size)
    support = jnp.linspace(v_min, v_max, atom_size, dtype=jnp.float32)

    q = dqn_forward(x, params, support, action_size, atom_size)
    q = jax.block_until_ready(q)

    # Compare against a reference that mirrors the kernel's bf16 trunk-matmul
    # cast (softmax / clamp / support-sum in f32).  The approx reciprocal and
    # the MXU support reduction add small (<1e-2) extra drift.
    q_ref = reference_forward(x, params, support, action_size, atom_size,
                              matmul_dtype=jnp.bfloat16)
    assert q.shape == (batch, action_size)
    assert jnp.allclose(q, q_ref, atol=3e-2, rtol=3e-2), "mismatch vs reference"

    print("KERNEL_OK")
</pallas_src>

<mosaic_0001>
module attributes {stable_mosaic.version = 11 : i64} {
  func.func @kernel(%arg0: i32, %arg1: memref<8x16xf32, #tpu.memory_space<vmem>>, %arg2: memref<16x128xbf16, #tpu.memory_space<vmem>>, %arg3: memref<1x128xf32, #tpu.memory_space<vmem>>, %arg4: memref<128x128xbf16, #tpu.memory_space<vmem>>, %arg5: memref<1x128xf32, #tpu.memory_space<vmem>>, %arg6: memref<128x512xbf16, #tpu.memory_space<vmem>>, %arg7: memref<1x512xf32, #tpu.memory_space<vmem>>, %arg8: memref<512x128xf32, #tpu.memory_space<vmem>>, %arg9: memref<512x128xf32, #tpu.memory_space<vmem>>, %arg10: memref<8x128xf32, #tpu.memory_space<vmem>>) attributes {dimension_semantics = [#tpu.dimension_semantics<parallel>], iteration_bounds = array<i64: 1>, scalar_prefetch = 0 : i64, scratch_operands = 0 : i64, tpu.core_type = #tpu.core_type<tc>, window_params = [{transform_indices = @transform_0, window_bounds = array<i64: 8, 16>}, {pipeline_mode = #tpu.pipeline_mode<synchronous>, transform_indices = @transform_1, window_bounds = array<i64: 16, 128>}, {pipeline_mode = #tpu.pipeline_mode<synchronous>, transform_indices = @transform_2, window_bounds = array<i64: 1, 128>}, {pipeline_mode = #tpu.pipeline_mode<synchronous>, transform_indices = @transform_3, window_bounds = array<i64: 128, 128>}, {pipeline_mode = #tpu.pipeline_mode<synchronous>, transform_indices = @transform_4, window_bounds = array<i64: 1, 128>}, {pipeline_mode = #tpu.pipeline_mode<synchronous>, transform_indices = @transform_5, window_bounds = array<i64: 128, 512>}, {pipeline_mode = #tpu.pipeline_mode<synchronous>, transform_indices = @transform_6, window_bounds = array<i64: 1, 512>}, {pipeline_mode = #tpu.pipeline_mode<synchronous>, transform_indices = @transform_7, window_bounds = array<i64: 512, 128>}, {pipeline_mode = #tpu.pipeline_mode<synchronous>, transform_indices = @transform_8, window_bounds = array<i64: 512, 128>}, {transform_indices = @transform_9, window_bounds = array<i64: 8, 128>}]} {
    %c0 = arith.constant 0 : index
    %c0_0 = arith.constant 0 : index
    %0 = vector.load %arg1[%c0, %c0_0] : memref<8x16xf32, #tpu.memory_space<vmem>>, vector<8x16xf32>
    %1 = arith.truncf %0 : vector<8x16xf32> to vector<8x16xbf16>
    %c0_1 = arith.constant 0 : index
    %c0_2 = arith.constant 0 : index
    %2 = vector.load %arg2[%c0_1, %c0_2] : memref<16x128xbf16, #tpu.memory_space<vmem>>, vector<16x128xbf16>
    %cst = arith.constant dense<0.000000e+00> : vector<8x128xf32>
    %3 = tpu.matmul %1, %2, %cst {dimension_numbers = #tpu.dot_dimension_numbers<[1], [0], [0], [1], [0, 0, 1, 1], [], []>} : vector<8x16xbf16>, vector<16x128xbf16>, vector<8x128xf32> -> vector<8x128xf32>
    %c0_3 = arith.constant 0 : index
    %c0_4 = arith.constant 0 : index
    %4 = vector.load %arg3[%c0_3, %c0_4] : memref<1x128xf32, #tpu.memory_space<vmem>>, vector<1x128xf32>
    %5 = vector.broadcast %4 : vector<1x128xf32> to vector<8x128xf32>
    %6 = arith.addf %3, %5 : vector<8x128xf32>
    %cst_5 = arith.constant 0.000000e+00 : f32
    %7 = vector.broadcast %cst_5 : f32 to vector<8x128xf32>
    %8 = arith.maximumf %6, %7 : vector<8x128xf32>
    %9 = arith.truncf %8 : vector<8x128xf32> to vector<8x128xbf16>
    %c0_6 = arith.constant 0 : index
    %c0_7 = arith.constant 0 : index
    %10 = vector.load %arg4[%c0_6, %c0_7] : memref<128x128xbf16, #tpu.memory_space<vmem>>, vector<128x128xbf16>
    %cst_8 = arith.constant dense<0.000000e+00> : vector<8x128xf32>
    %11 = tpu.matmul %9, %10, %cst_8 {dimension_numbers = #tpu.dot_dimension_numbers<[1], [0], [0], [1], [0, 0, 1, 1], [], []>} : vector<8x128xbf16>, vector<128x128xbf16>, vector<8x128xf32> -> vector<8x128xf32>
    %c0_9 = arith.constant 0 : index
    %c0_10 = arith.constant 0 : index
    %12 = vector.load %arg5[%c0_9, %c0_10] : memref<1x128xf32, #tpu.memory_space<vmem>>, vector<1x128xf32>
    %13 = vector.broadcast %12 : vector<1x128xf32> to vector<8x128xf32>
    %14 = arith.addf %11, %13 : vector<8x128xf32>
    %cst_11 = arith.constant 0.000000e+00 : f32
    %15 = vector.broadcast %cst_11 : f32 to vector<8x128xf32>
    %16 = arith.maximumf %14, %15 : vector<8x128xf32>
    %17 = arith.truncf %16 : vector<8x128xf32> to vector<8x128xbf16>
    %c0_12 = arith.constant 0 : index
    %c0_13 = arith.constant 0 : index
    %18 = vector.load %arg6[%c0_12, %c0_13] : memref<128x512xbf16, #tpu.memory_space<vmem>>, vector<128x128xbf16>
    %c0_14 = arith.constant 0 : index
    %c0_15 = arith.constant 0 : index
    %19 = vector.load %arg7[%c0_14, %c0_15] : memref<1x512xf32, #tpu.memory_space<vmem>>, vector<1x128xf32>
    %cst_16 = arith.constant dense<0.000000e+00> : vector<8x128xf32>
    %20 = tpu.matmul %17, %18, %cst_16 {dimension_numbers = #tpu.dot_dimension_numbers<[1], [0], [0], [1], [0, 0, 1, 1], [], []>} : vector<8x128xbf16>, vector<128x128xbf16>, vector<8x128xf32> -> vector<8x128xf32>
    %21 = vector.broadcast %19 : vector<1x128xf32> to vector<8x128xf32>
    %22 = arith.addf %20, %21 : vector<8x128xf32>
    %cst_17 = arith.constant dense<0xFF800000> : vector<8xf32>
    %23 = vector.multi_reduction <maximumf>, %22, %cst_17 [1] : vector<8x128xf32> to vector<8xf32>
    %24 = vector.shape_cast %23 : vector<8xf32> to vector<8x1xf32>
    %25 = vector.broadcast %24 : vector<8x1xf32> to vector<8x128xf32>
    %26 = arith.subf %22, %25 : vector<8x128xf32>
    %27 = math.exp %26 : vector<8x128xf32>
    %cst_18 = arith.constant dense<0.000000e+00> : vector<8xf32>
    %28 = vector.multi_reduction <add>, %27, %cst_18 [1] : vector<8x128xf32> to vector<8xf32>
    %29 = vector.shape_cast %28 : vector<8xf32> to vector<8x1xf32>
    %cst_19 = arith.constant 1.000000e-03 : f32
    %30 = vector.broadcast %cst_19 : f32 to vector<8x1xf32>
    %31 = arith.mulf %30, %29 : vector<8x1xf32>
    %32 = vector.broadcast %31 : vector<8x1xf32> to vector<8x128xf32>
    %33 = arith.maximumf %27, %32 : vector<8x128xf32>
    %c0_20 = arith.constant 0 : index
    %c128 = arith.constant 128 : index
    %34 = vector.load %arg6[%c0_20, %c128] : memref<128x512xbf16, #tpu.memory_space<vmem>>, vector<128x128xbf16>
    %c0_21 = arith.constant 0 : index
    %c128_22 = arith.constant 128 : index
    %35 = vector.load %arg7[%c0_21, %c128_22] : memref<1x512xf32, #tpu.memory_space<vmem>>, vector<1x128xf32>
    %cst_23 = arith.constant dense<0.000000e+00> : vector<8x128xf32>
    %36 = tpu.matmul %17, %34, %cst_23 {dimension_numbers = #tpu.dot_dimension_numbers<[1], [0], [0], [1], [0, 0, 1, 1], [], []>} : vector<8x128xbf16>, vector<128x128xbf16>, vector<8x128xf32> -> vector<8x128xf32>
    %37 = vector.broadcast %35 : vector<1x128xf32> to vector<8x128xf32>
    %38 = arith.addf %36, %37 : vector<8x128xf32>
    %cst_24 = arith.constant dense<0xFF800000> : vector<8xf32>
    %39 = vector.multi_reduction <maximumf>, %38, %cst_24 [1] : vector<8x128xf32> to vector<8xf32>
    %40 = vector.shape_cast %39 : vector<8xf32> to vector<8x1xf32>
    %41 = vector.broadcast %40 : vector<8x1xf32> to vector<8x128xf32>
    %42 = arith.subf %38, %41 : vector<8x128xf32>
    %43 = math.exp %42 : vector<8x128xf32>
    %cst_25 = arith.constant dense<0.000000e+00> : vector<8xf32>
    %44 = vector.multi_reduction <add>, %43, %cst_25 [1] : vector<8x128xf32> to vector<8xf32>
    %45 = vector.shape_cast %44 : vector<8xf32> to vector<8x1xf32>
    %cst_26 = arith.constant 1.000000e-03 : f32
    %46 = vector.broadcast %cst_26 : f32 to vector<8x1xf32>
    %47 = arith.mulf %46, %45 : vector<8x1xf32>
    %48 = vector.broadcast %47 : vector<8x1xf32> to vector<8x128xf32>
    %49 = arith.maximumf %43, %48 : vector<8x128xf32>
    %c0_27 = arith.constant 0 : index
    %c256 = arith.constant 256 : index
    %50 = vector.load %arg6[%c0_27, %c256] : memref<128x512xbf16, #tpu.memory_space<vmem>>, vector<128x128xbf16>
    %c0_28 = arith.constant 0 : index
    %c256_29 = arith.constant 256 : index
    %51 = vector.load %arg7[%c0_28, %c256_29] : memref<1x512xf32, #tpu.memory_space<vmem>>, vector<1x128xf32>
    %cst_30 = arith.constant dense<0.000000e+00> : vector<8x128xf32>
    %52 = tpu.matmul %17, %50, %cst_30 {dimension_numbers = #tpu.dot_dimension_numbers<[1], [0], [0], [1], [0, 0, 1, 1], [], []>} : vector<8x128xbf16>, vector<128x128xbf16>, vector<8x128xf32> -> vector<8x128xf32>
    %53 = vector.broadcast %51 : vector<1x128xf32> to vector<8x128xf32>
    %54 = arith.addf %52, %53 : vector<8x128xf32>
    %cst_31 = arith.constant dense<0xFF800000> : vector<8xf32>
    %55 = vector.multi_reduction <maximumf>, %54, %cst_31 [1] : vector<8x128xf32> to vector<8xf32>
    %56 = vector.shape_cast %55 : vector<8xf32> to vector<8x1xf32>
    %57 = vector.broadcast %56 : vector<8x1xf32> to vector<8x128xf32>
    %58 = arith.subf %54, %57 : vector<8x128xf32>
    %59 = math.exp %58 : vector<8x128xf32>
    %cst_32 = arith.constant dense<0.000000e+00> : vector<8xf32>
    %60 = vector.multi_reduction <add>, %59, %cst_32 [1] : vector<8x128xf32> to vector<8xf32>
    %61 = vector.shape_cast %60 : vector<8xf32> to vector<8x1xf32>
    %cst_33 = arith.constant 1.000000e-03 : f32
    %62 = vector.broadcast %cst_33 : f32 to vector<8x1xf32>
    %63 = arith.mulf %62, %61 : vector<8x1xf32>
    %64 = vector.broadcast %63 : vector<8x1xf32> to vector<8x128xf32>
    %65 = arith.maximumf %59, %64 : vector<8x128xf32>
    %c0_34 = arith.constant 0 : index
    %c384 = arith.constant 384 : index
    %66 = vector.load %arg6[%c0_34, %c384] : memref<128x512xbf16, #tpu.memory_space<vmem>>, vector<128x128xbf16>
    %c0_35 = arith.constant 0 : index
    %c384_36 = arith.constant 384 : index
    %67 = vector.load %arg7[%c0_35, %c384_36] : memref<1x512xf32, #tpu.memory_space<vmem>>, vector<1x128xf32>
    %cst_37 = arith.constant dense<0.000000e+00> : vector<8x128xf32>
    %68 = tpu.matmul %17, %66, %cst_37 {dimension_numbers = #tpu.dot_dimension_numbers<[1], [0], [0], [1], [0, 0, 1, 1], [], []>} : vector<8x128xbf16>, vector<128x128xbf16>, vector<8x128xf32> -> vector<8x128xf32>
    %69 = vector.broadcast %67 : vector<1x128xf32> to vector<8x128xf32>
    %70 = arith.addf %68, %69 : vector<8x128xf32>
    %cst_38 = arith.constant dense<0xFF800000> : vector<8xf32>
    %71 = vector.multi_reduction <maximumf>, %70, %cst_38 [1] : vector<8x128xf32> to vector<8xf32>
    %72 = vector.shape_cast %71 : vector<8xf32> to vector<8x1xf32>
    %73 = vector.broadcast %72 : vector<8x1xf32> to vector<8x128xf32>
    %74 = arith.subf %70, %73 : vector<8x128xf32>
    %75 = math.exp %74 : vector<8x128xf32>
    %cst_39 = arith.constant dense<0.000000e+00> : vector<8xf32>
    %76 = vector.multi_reduction <add>, %75, %cst_39 [1] : vector<8x128xf32> to vector<8xf32>
    %77 = vector.shape_cast %76 : vector<8xf32> to vector<8x1xf32>
    %cst_40 = arith.constant 1.000000e-03 : f32
    %78 = vector.broadcast %cst_40 : f32 to vector<8x1xf32>
    %79 = arith.mulf %78, %77 : vector<8x1xf32>
    %80 = vector.broadcast %79 : vector<8x1xf32> to vector<8x128xf32>
    %81 = arith.maximumf %75, %80 : vector<8x128xf32>
    %82 = tpu.concatenate %27, %43, %59, %75 in 1 : vector<8x128xf32>, vector<8x128xf32>, vector<8x128xf32>, vector<8x128xf32> -> vector<8x512xf32>
    %83 = tpu.concatenate %33, %49, %65, %81 in 1 : vector<8x128xf32>, vector<8x128xf32>, vector<8x128xf32>, vector<8x128xf32> -> vector<8x512xf32>
    %c0_41 = arith.constant 0 : index
    %c0_42 = arith.constant 0 : index
    %84 = vector.load %arg8[%c0_41, %c0_42] : memref<512x128xf32, #tpu.memory_space<vmem>>, vector<512x128xf32>
    %cst_43 = arith.constant dense<0.000000e+00> : vector<8x128xf32>
    %85 = tpu.matmul %83, %84, %cst_43 {dimension_numbers = #tpu.dot_dimension_numbers<[1], [0], [0], [1], [0, 0, 1, 1], [], []>} : vector<8x512xf32>, vector<512x128xf32>, vector<8x128xf32> -> vector<8x128xf32>
    %c0_44 = arith.constant 0 : index
    %c0_45 = arith.constant 0 : index
    %86 = vector.load %arg9[%c0_44, %c0_45] : memref<512x128xf32, #tpu.memory_space<vmem>>, vector<512x128xf32>
    %cst_46 = arith.constant dense<0.000000e+00> : vector<8x128xf32>
    %87 = tpu.matmul %82, %86, %cst_46 {dimension_numbers = #tpu.dot_dimension_numbers<[1], [0], [0], [1], [0, 0, 1, 1], [], []>} : vector<8x512xf32>, vector<512x128xf32>, vector<8x128xf32> -> vector<8x128xf32>
    %cst_47 = arith.constant 5.000000e-01 : f32
    %88 = vector.broadcast %cst_47 : f32 to vector<8x128xf32>
    %89 = arith.maximumf %87, %88 : vector<8x128xf32>
    %90 = tpu.reciprocal %89 {approx = true} : vector<8x128xf32> -> vector<8x128xf32>
    %91 = arith.mulf %85, %90 : vector<8x128xf32>
    %c0_48 = arith.constant 0 : index
    %c0_49 = arith.constant 0 : index
    %92 = vector.load %arg10[%c0_48, %c0_49] : memref<8x128xf32, #tpu.memory_space<vmem>>, vector<8x128xf32>
    tpu.vector_store %arg10[%c0_48, %c0_49], %91 {strides = array<i32>} : memref<8x128xf32, #tpu.memory_space<vmem>>, vector<8x128xf32>,
    return
  }
  func.func @transform_0(%arg0: i32) -> (i32, i32) {
    %c0_i32 = arith.constant 0 : i32
    %c0_i32_0 = arith.constant 0 : i32
    return %arg0, %c0_i32 : i32, i32
  }
  func.func @transform_1(%arg0: i32) -> (i32, i32) {
    %c0_i32 = arith.constant 0 : i32
    %c0_i32_0 = arith.constant 0 : i32
    %c0_i32_1 = arith.constant 0 : i32
    return %c0_i32, %c0_i32_0 : i32, i32
  }
  func.func @transform_2(%arg0: i32) -> (i32, i32) {
    %c0_i32 = arith.constant 0 : i32
    %c0_i32_0 = arith.constant 0 : i32
    %c0_i32_1 = arith.constant 0 : i32
    return %c0_i32, %c0_i32_0 : i32, i32
  }
  func.func @transform_3(%arg0: i32) -> (i32, i32) {
    %c0_i32 = arith.constant 0 : i32
    %c0_i32_0 = arith.constant 0 : i32
    %c0_i32_1 = arith.constant 0 : i32
    return %c0_i32, %c0_i32_0 : i32, i32
  }
  func.func @transform_4(%arg0: i32) -> (i32, i32) {
    %c0_i32 = arith.constant 0 : i32
    %c0_i32_0 = arith.constant 0 : i32
    %c0_i32_1 = arith.constant 0 : i32
    return %c0_i32, %c0_i32_0 : i32, i32
  }
  func.func @transform_5(%arg0: i32) -> (i32, i32) {
    %c0_i32 = arith.constant 0 : i32
    %c0_i32_0 = arith.constant 0 : i32
    %c0_i32_1 = arith.constant 0 : i32
    return %c0_i32, %c0_i32_0 : i32, i32
  }
  func.func @transform_6(%arg0: i32) -> (i32, i32) {
    %c0_i32 = arith.constant 0 : i32
    %c0_i32_0 = arith.constant 0 : i32
    %c0_i32_1 = arith.constant 0 : i32
    return %c0_i32, %c0_i32_0 : i32, i32
  }
  func.func @transform_7(%arg0: i32) -> (i32, i32) {
    %c0_i32 = arith.constant 0 : i32
    %c0_i32_0 = arith.constant 0 : i32
    %c0_i32_1 = arith.constant 0 : i32
    return %c0_i32, %c0_i32_0 : i32, i32
  }
  func.func @transform_8(%arg0: i32) -> (i32, i32) {
    %c0_i32 = arith.constant 0 : i32
    %c0_i32_0 = arith.constant 0 : i32
    %c0_i32_1 = arith.constant 0 : i32
    return %c0_i32, %c0_i32_0 : i32, i32
  }
  func.func @transform_9(%arg0: i32) -> (i32, i32) {
    %c0_i32 = arith.constant 0 : i32
    %c0_i32_0 = arith.constant 0 : i32
    return %arg0, %c0_i32 : i32, i32
  }
}

</mosaic_0001>

<llo_original>
// kernel: tpu_custom_call.1
$region0: #{tpu_custom_call.1}
  #allocation0 [shape = 'u32[]', space=smem, size = 0x4, offset = 0x4, fixed_abs, tag = 'smem constant byte address 0x4 - core index']
  #allocation1 [shape = 'u32[144,128]{1,0:T(1,128)}', space=vmem, size = 0x12000, scoped, tag = 'internal scratch']
  %s0 = inlined_call_operand.hbm [shape: f32[8,16], index: 0, kind: input, shape index: {}]
  %s1 = inlined_call_operand.hbm [shape: bf16[16,128], index: 1, kind: input, shape index: {}]
  %s2 = inlined_call_operand.vmem [shape: f32[1,128], index: 2, kind: input, shape index: {}]
  %s3 = inlined_call_operand.hbm [shape: bf16[128,128], index: 3, kind: input, shape index: {}]
  %s4 = inlined_call_operand.vmem [shape: f32[1,128], index: 4, kind: input, shape index: {}]
  %s5 = inlined_call_operand.hbm [shape: bf16[128,512], index: 5, kind: input, shape index: {}]
  %s6 = inlined_call_operand.vmem [shape: f32[1,512], index: 6, kind: input, shape index: {}]
  %s7 = inlined_call_operand.hbm [shape: f32[512,128], index: 7, kind: input, shape index: {}]
  %s8 = inlined_call_operand.hbm [shape: f32[512,128], index: 8, kind: input, shape index: {}]
  %s9 = inlined_call_operand.hbm [shape: f32[8,128], index: 9, kind: output, shape index: {}]
  %s10 = sld [smem:[#allocation0]]
  $region70: #{tpu_custom_call.1} parent=0
    _
  %s12 = ssub.s32 1, %s10
  %s13 = scalar_select 0, %s12, %s10
  $region1: #{tpu_custom_call.1} parent=0
    #allocation2 [shape = 'u8[4096]{0}', space=vmem, size = 0x1000, scoped, tag = 'input window, operand 0, single buffered']
    #allocation3 [shape = 's32[1]{0}', space=sflag, size = 0x4, scoped, tag = 'scoped memory for tpu_custom_call.1']
    #allocation4 [shape = 's32[1]{0}', space=sflag, size = 0x4, scoped, tag = 'scoped memory for tpu_custom_call.1']
    #allocation5 [shape = 'u8[4096]{0}', space=vmem, size = 0x1000, scoped, tag = 'input window, operand 1, single buffered']
    #allocation6 [shape = 's32[1]{0}', space=sflag, size = 0x4, scoped, tag = 'scoped memory for tpu_custom_call.1']
    #allocation7 [shape = 'u8[32768]{0}', space=vmem, size = 0x8000, scoped, tag = 'input window, operand 3, single buffered']
    #allocation8 [shape = 'u8[131072]{0}', space=vmem, size = 0x20000, scoped, tag = 'input window, operand 5, single buffered']
    #allocation9 [shape = 's32[1]{0}', space=sflag, size = 0x4, scoped, tag = 'scoped memory for tpu_custom_call.1']
    #allocation10 [shape = 'u8[262144]{0}', space=vmem, size = 0x40000, scoped, tag = 'input window, operand 7, single buffered']
    #allocation11 [shape = 'u8[262144]{0}', space=vmem, size = 0x40000, scoped, tag = 'input window, operand 8, single buffered']
    #allocation12 [shape = 's32[1]{0}', space=sflag, size = 0x4, scoped, tag = 'scoped memory for tpu_custom_call.1']
    #allocation13 [shape = 'u8[4096]{0}', space=vmem, size = 0x1000, scoped, tag = 'output window, operand 0, single buffered']
    %14 = vsyncpa [#allocation3], 0
    %15 = vsyncpa [#allocation6], 0
    %16 = vsyncpa [#allocation9], 0
    %17 = vsyncpa [#allocation12], 0
    %18 = vsyncpa [#allocation4], 0
    // Predicated region
    $region2: #{tpu_custom_call.1} parent=1 // pred_check
      _
    $region3: #{tpu_custom_call.1} parent=1 // pred_check_branch
      %20 = sbr.rel (0) target = $region5
    $region4: #{tpu_custom_call.1} parent=1 // pred_region
      %s22 = ssub.s32 128, 128
      %23 = vsyncadd [#allocation3], %s22
      %s25 = sshll.u32 [#allocation2], 4
      %s26 = int_to_ptr.vmem [resolvable:$true] %s25
      %28 = dma.hbm_to_vmem [thread:$0]  %s0, 128, %s26, [#allocation3]
    $region5: #{tpu_custom_call.1} parent=1 // pred_fallthru
      _
    // Predicated region
    $region6: #{tpu_custom_call.1} parent=1 // pred_check
      _
    $region7: #{tpu_custom_call.1} parent=1 // pred_check_branch
      %30 = sbr.rel (0) target = $region9
    $region8: #{tpu_custom_call.1} parent=1 // pred_region
      %s32 = ssub.s32 128, 128
      %33 = vsyncadd [#allocation6], %s32
      %s34 = sshll.u32 [#allocation5], 4
      %s35 = int_to_ptr.vmem [resolvable:$true] %s34
      %40 = dma.hbm_to_vmem [thread:$0]  %s1, 128, %s35, [#allocation6], 64, 64, 4
    $region9: #{tpu_custom_call.1} parent=1 // pred_fallthru
      _
    // Predicated region
    $region10: #{tpu_custom_call.1} parent=1 // pred_check
      _
    $region11: #{tpu_custom_call.1} parent=1 // pred_check_branch
      %42 = sbr.rel (0) target = $region13
    $region12: #{tpu_custom_call.1} parent=1 // pred_region
      _
    $region13: #{tpu_custom_call.1} parent=1 // pred_fallthru
      _
    // Predicated region
    $region14: #{tpu_custom_call.1} parent=1 // pred_check
      _
    $region15: #{tpu_custom_call.1} parent=1 // pred_check_branch
      %44 = sbr.rel (0) target = $region17
    $region16: #{tpu_custom_call.1} parent=1 // pred_region
      %s46 = ssub.s32 1024, 1024
      %47 = vsyncadd [#allocation6], %s46
      %s48 = sshll.u32 [#allocation7], 4
      %s49 = int_to_ptr.vmem [resolvable:$true] %s48
      %54 = dma.hbm_to_vmem [thread:$0]  %s3, 1024, %s49, [#allocation6], 64, 64, 4
    $region17: #{tpu_custom_call.1} parent=1 // pred_fallthru
      _
    // Predicated region
    $region18: #{tpu_custom_call.1} parent=1 // pred_check
      _
    $region19: #{tpu_custom_call.1} parent=1 // pred_check_branch
      %56 = sbr.rel (0) target = $region21
    $region20: #{tpu_custom_call.1} parent=1 // pred_region
      _
    $region21: #{tpu_custom_call.1} parent=1 // pred_fallthru
      _
    // Predicated region
    $region22: #{tpu_custom_call.1} parent=1 // pred_check
      _
    $region23: #{tpu_custom_call.1} parent=1 // pred_check_branch
      %58 = sbr.rel (0) target = $region25
    $region24: #{tpu_custom_call.1} parent=1 // pred_region
      %s60 = ssub.s32 4096, 4096
      %61 = vsyncadd [#allocation9], %s60
      %s62 = sshll.u32 [#allocation8], 4
      %s63 = int_to_ptr.vmem [resolvable:$true] %s62
      %68 = dma.hbm_to_vmem [thread:$0]  %s5, 4096, %s63, [#allocation9], 256, 256, 16
    $region25: #{tpu_custom_call.1} parent=1 // pred_fallthru
      _
    // Predicated region
    $region26: #{tpu_custom_call.1} parent=1 // pred_check
      _
    $region27: #{tpu_custom_call.1} parent=1 // pred_check_branch
      %70 = sbr.rel (0) target = $region29
    $region28: #{tpu_custom_call.1} parent=1 // pred_region
      _
    $region29: #{tpu_custom_call.1} parent=1 // pred_fallthru
      _
    // Predicated region
    $region30: #{tpu_custom_call.1} parent=1 // pred_check
      _
    $region31: #{tpu_custom_call.1} parent=1 // pred_check_branch
      %72 = sbr.rel (0) target = $region33
    $region32: #{tpu_custom_call.1} parent=1 // pred_region
      %s74 = ssub.s32 8192, 8192
      %75 = vsyncadd [#allocation9], %s74
      %s76 = sshll.u32 [#allocation10], 4
      %s77 = int_to_ptr.vmem [resolvable:$true] %s76
      %82 = dma.hbm_to_vmem [thread:$0]  %s7, 8192, %s77, [#allocation9], 128, 128, 8
    $region33: #{tpu_custom_call.1} parent=1 // pred_fallthru
      _
    // Predicated region
    $region34: #{tpu_custom_call.1} parent=1 // pred_check
      _
    $region35: #{tpu_custom_call.1} parent=1 // pred_check_branch
      %84 = sbr.rel (0) target = $region37
    $region36: #{tpu_custom_call.1} parent=1 // pred_region
      %s86 = ssub.s32 8192, 8192
      %87 = vsyncadd [#allocation12], %s86
      %s88 = sshll.u32 [#allocation11], 4
      %s89 = int_to_ptr.vmem [resolvable:$true] %s88
      %94 = dma.hbm_to_vmem [thread:$0]  %s8, 8192, %s89, [#allocation12], 128, 128, 8
    $region37: #{tpu_custom_call.1} parent=1 // pred_fallthru
      _
    // Predicated region
    $region38: #{tpu_custom_call.1} parent=1 // pred_check
      _
    $region39: #{tpu_custom_call.1} parent=1 // pred_check_branch
      %96 = sbr.rel (0) target = $region41
    $region40: #{tpu_custom_call.1} parent=1 // pred_region
      %97 = dma.done [#allocation3], 128
    $region41: #{tpu_custom_call.1} parent=1 // pred_fallthru
      _
    // Predicated region
    $region42: #{tpu_custom_call.1} parent=1 // pred_check
      _
    $region43: #{tpu_custom_call.1} parent=1 // pred_check_branch
      %99 = sbr.rel (0) target = $region45
    $region44: #{tpu_custom_call.1} parent=1 // pred_region
      %100 = dma.done [#allocation6], 128
    $region45: #{tpu_custom_call.1} parent=1 // pred_fallthru
      _
    // Predicated region
    $region46: #{tpu_custom_call.1} parent=1 // pred_check
      _
    $region47: #{tpu_custom_call.1} parent=1 // pred_check_branch
      %102 = sbr.rel (0) target = $region49
    $region48: #{tpu_custom_call.1} parent=1 // pred_region
      %103 = dma.done [#allocation6], 1024
    $region49: #{tpu_custom_call.1} parent=1 // pred_fallthru
      _
    // Predicated region
    $region50: #{tpu_custom_call.1} parent=1 // pred_check
      _
    $region51: #{tpu_custom_call.1} parent=1 // pred_check_branch
      %105 = sbr.rel (0) target = $region53
    $region52: #{tpu_custom_call.1} parent=1 // pred_region
      %106 = dma.done [#allocation9], 4096
    $region53: #{tpu_custom_call.1} parent=1 // pred_fallthru
      _
    // Predicated region
    $region54: #{tpu_custom_call.1} parent=1 // pred_check
      _
    $region55: #{tpu_custom_call.1} parent=1 // pred_check_branch
      %108 = sbr.rel (0) target = $region57
    $region56: #{tpu_custom_call.1} parent=1 // pred_region
      %109 = dma.done [#allocation9], 8192
    $region57: #{tpu_custom_call.1} parent=1 // pred_fallthru
      _
    // Predicated region
    $region58: #{tpu_custom_call.1} parent=1 // pred_check
      _
    $region59: #{tpu_custom_call.1} parent=1 // pred_check_branch
      %111 = sbr.rel (0) target = $region61
    $region60: #{tpu_custom_call.1} parent=1 // pred_region
      %112 = dma.done [#allocation12], 8192
    $region61: #{tpu_custom_call.1} parent=1 // pred_fallthru
      _
    %v114 = vld [vmem:[#allocation2] sm:$0xff]
    %v115 = vpack.c.bf16 %v114, %v114
    %v116 = vld [vmem:[#allocation5] sm:$0xf]
    %v117 = vld [vmem:[#allocation5 + $0x4] sm:$0xf]
    %v118 = vld [vmem:[%s2] sm:$0x1]
    %v120 = vlaneseq
    %v121 = vshrl.u32 %v120, 7
    %v122 = vsub.s32 0, %v121
    %v123 = vrot.slane %v118, %v122
    %v127 = vunpack.c.l.b16 %v116
    %v128 = vunpack.c.l.b16 %v117
    %v129 = vpack.c.b16 %v128, %v127
    %vm131 = vcmask 130048
    %v133 = vsel %vm131, %v115, 0
    %135 = vmatprep.subr.bf16.mxu0 0
    %136 = vmatpush1.bf16.msra.mxu0 %v129
    %137 = vmatprep.subr.bf16.mxu0 0
    %138 = vmatpush1.bf16.msra.mxu0 0
    %139 = vmatprep.subr.bf16.mxu0 0
    %140 = vmatpush1.bf16.msra.mxu0 0
    %141 = vmatprep.subr.bf16.mxu0 0
    %142 = vmatpush1.bf16.msra.mxu0 0
    %143 = vmatprep.subr.bf16.mxu0 0
    %144 = vmatpush1.bf16.msra.mxu0 0
    %145 = vmatprep.subr.bf16.mxu0 0
    %146 = vmatpush1.bf16.msra.mxu0 0
    %147 = vmatprep.subr.bf16.mxu0 0
    %148 = vmatpush1.bf16.msra.mxu0 0
    %149 = vmatprep.subr.bf16.mxu0 0
    %150 = vmatpush1.bf16.msra.mxu0 0
    %151 = vmatprep.subr.bf16.mxu0 0
    %152 = vmatpush1.bf16.msra.mxu0 0
    %153 = vmatprep.subr.bf16.mxu0 0
    %154 = vmatpush1.bf16.msra.mxu0 0
    %155 = vmatprep.subr.bf16.mxu0 0
    %156 = vmatpush1.bf16.msra.mxu0 0
    %157 = vmatprep.subr.bf16.mxu0 0
    %158 = vmatpush1.bf16.msra.mxu0 0
    %159 = vmatprep.subr.bf16.mxu0 0
    %160 = vmatpush1.bf16.msra.mxu0 0
    %161 = vmatprep.subr.bf16.mxu0 0
    %162 = vmatpush1.bf16.msra.mxu0 0
    %163 = vmatprep.subr.bf16.mxu0 0
    %164 = vmatpush1.bf16.msra.mxu0 0
    %165 = vmatprep.subr.bf16.mxu0 0
    %166 = vmatpush1.bf16.msra.mxu0 0
    %167 = vmatprep.mubr.bf16.mxu0 0
    %168 = vmatmul.mubr.bf16.gmra.mrb[0].mxu0 %v133
    %v169 = vpop.f32.mrb[0].mxu0
    %v170 = vadd.f32 %v123, %v169
    %v171 = vpop.f32.mrb[0].mxu0
    %v172 = vpop.f32.mrb[0].mxu0
    %v173 = vpop.f32.mrb[0].mxu0
    %174 = vdwg.mxu0
    %v175 = vmax.f32 %v170, 0.0
    %v176 = vpack.c.bf16 %v175, %v175
    %v177 = vld [vmem:[#allocation7] sm:$0xf]
    %v178 = vld [vmem:[#allocation7 + $0x4] sm:$0xf]
    %v179 = vld [vmem:[#allocation7 + $0x8] sm:$0xf]
    %v180 = vld [vmem:[#allocation7 + $0xc] sm:$0xf]
    %v181 = vld [vmem:[#allocation7 + $0x10] sm:$0xf]
    %v182 = vld [vmem:[#allocation7 + $0x14] sm:$0xf]
    %v183 = vld [vmem:[#allocation7 + $0x18] sm:$0xf]
    %v184 = vld [vmem:[#allocation7 + $0x1c] sm:$0xf]
    %v185 = vld [vmem:[#allocation7 + $0x20] sm:$0xf]
    %v186 = vld [vmem:[#allocation7 + $0x24] sm:$0xf]
    %v187 = vld [vmem:[#allocation7 + $0x28] sm:$0xf]
    %v188 = vld [vmem:[#allocation7 + $0x2c] sm:$0xf]
    %v189 = vld [vmem:[#allocation7 + $0x30] sm:$0xf]
    %v190 = vld [vmem:[#allocation7 + $0x34] sm:$0xf]
    %v191 = vld [vmem:[#allocation7 + $0x38] sm:$0xf]
    %v192 = vld [vmem:[#allocation7 + $0x3c] sm:$0xf]
    %v193 = vld [vmem:[%s4] sm:$0x1]
    %v195 = vlaneseq
    %v196 = vshrl.u32 %v195, 7
    %v197 = vsub.s32 0, %v196
    %v198 = vrot.slane %v193, %v197
    %v216 = vunpack.c.l.b16 %v177
    %v217 = vunpack.c.l.b16 %v178
    %v218 = vunpack.c.l.b16 %v179
    %v219 = vunpack.c.l.b16 %v180
    %v220 = vunpack.c.l.b16 %v181
    %v221 = vunpack.c.l.b16 %v182
    %v222 = vunpack.c.l.b16 %v183
    %v223 = vunpack.c.l.b16 %v184
    %v224 = vunpack.c.l.b16 %v185
    %v225 = vunpack.c.l.b16 %v186
    %v226 = vunpack.c.l.b16 %v187
    %v227 = vunpack.c.l.b16 %v188
    %v228 = vunpack.c.l.b16 %v189
    %v229 = vunpack.c.l.b16 %v190
    %v230 = vunpack.c.l.b16 %v191
    %v231 = vunpack.c.l.b16 %v192
    %v232 = vpack.c.b16 %v217, %v216
    %v233 = vpack.c.b16 %v219, %v218
    %v234 = vpack.c.b16 %v221, %v220
    %v235 = vpack.c.b16 %v223, %v222
    %v236 = vpack.c.b16 %v225, %v224
    %v237 = vpack.c.b16 %v227, %v226
    %v238 = vpack.c.b16 %v229, %v228
    %v239 = vpack.c.b16 %v231, %v230
    %248 = vmatprep.subr.bf16.mxu0 0
    %249 = vmatpush1.bf16.msra.mxu0 %v232
    %250 = vmatprep.subr.bf16.mxu0 0
    %251 = vmatpush1.bf16.msra.mxu0 %v233
    %252 = vmatprep.subr.bf16.mxu0 0
    %253 = vmatpush1.bf16.msra.mxu0 %v234
    %254 = vmatprep.subr.bf16.mxu0 0
    %255 = vmatpush1.bf16.msra.mxu0 %v235
    %256 = vmatprep.subr.bf16.mxu0 0
    %257 = vmatpush1.bf16.msra.mxu0 %v236
    %258 = vmatprep.subr.bf16.mxu0 0
    %259 = vmatpush1.bf16.msra.mxu0 %v237
    %260 = vmatprep.subr.bf16.mxu0 0
    %261 = vmatpush1.bf16.msra.mxu0 %v238
    %262 = vmatprep.subr.bf16.mxu0 0
    %263 = vmatpush1.bf16.msra.mxu0 %v239
    %264 = vmatprep.subr.bf16.mxu0 0
    %265 = vmatpush1.bf16.msra.mxu0 0
    %266 = vmatprep.subr.bf16.mxu0 0
    %267 = vmatpush1.bf16.msra.mxu0 0
    %268 = vmatprep.subr.bf16.mxu0 0
    %269 = vmatpush1.bf16.msra.mxu0 0
    %270 = vmatprep.subr.bf16.mxu0 0
    %271 = vmatpush1.bf16.msra.mxu0 0
    %272 = vmatprep.subr.bf16.mxu0 0
    %273 = vmatpush1.bf16.msra.mxu0 0
    %274 = vmatprep.subr.bf16.mxu0 0
    %275 = vmatpush1.bf16.msra.mxu0 0
    %276 = vmatprep.subr.bf16.mxu0 0
    %277 = vmatpush1.bf16.msra.mxu0 0
    %278 = vmatprep.subr.bf16.mxu0 0
    %279 = vmatpush1.bf16.msra.mxu0 0
    %280 = vmatprep.mubr.bf16.mxu0 0
    %281 = vmatmul.mubr.bf16.gmra.mrb[0].mxu0 %v176
    %v282 = vpop.f32.mrb[0].mxu0
    %v283 = vadd.f32 %v198, %v282
    %v284 = vpop.f32.mrb[0].mxu0
    %v285 = vpop.f32.mrb[0].mxu0
    %v286 = vpop.f32.mrb[0].mxu0
    %287 = vdwg.mxu0
    %v288 = vmax.f32 %v283, 0.0
    %v289 = vpack.c.bf16 %v288, %v288
    %v290 = vld [vmem:[#allocation8] sm:$0xf]
    %v291 = vld [vmem:[#allocation8 + $0x10] sm:$0xf]
    %v292 = vld [vmem:[#allocation8 + $0x20] sm:$0xf]
    %v293 = vld [vmem:[#allocation8 + $0x30] sm:$0xf]
    %v294 = vld [vmem:[#allocation8 + $0x40] sm:$0xf]
    %v295 = vld [vmem:[#allocation8 + $0x50] sm:$0xf]
    %v296 = vld [vmem:[#allocation8 + $0x60] sm:$0xf]
    %v297 = vld [vmem:[#allocation8 + $0x70] sm:$0xf]
    %v298 = vld [vmem:[#allocation8 + $0x80] sm:$0xf]
    %v299 = vld [vmem:[#allocation8 + $0x90] sm:$0xf]
    %v300 = vld [vmem:[#allocation8 + $0xa0] sm:$0xf]
    %v301 = vld [vmem:[#allocation8 + $0xb0] sm:$0xf]
    %v302 = vld [vmem:[#allocation8 + $0xc0] sm:$0xf]
    %v303 = vld [vmem:[#allocation8 + $0xd0] sm:$0xf]
    %v304 = vld [vmem:[#allocation8 + $0xe0] sm:$0xf]
    %v305 = vld [vmem:[#allocation8 + $0xf0] sm:$0xf]
    %v306 = vld [vmem:[%s6] sm:$0x1]
    %v308 = vlaneseq
    %v309 = vshrl.u32 %v308, 7
    %v310 = vsub.s32 0, %v309
    %v311 = vrot.slane %v306, %v310
    %v329 = vunpack.c.l.b16 %v290
    %v330 = vunpack.c.l.b16 %v291
    %v331 = vunpack.c.l.b16 %v292
    %v332 = vunpack.c.l.b16 %v293
    %v333 = vunpack.c.l.b16 %v294
    %v334 = vunpack.c.l.b16 %v295
    %v335 = vunpack.c.l.b16 %v296
    %v336 = vunpack.c.l.b16 %v297
    %v337 = vunpack.c.l.b16 %v298
    %v338 = vunpack.c.l.b16 %v299
    %v339 = vunpack.c.l.b16 %v300
    %v340 = vunpack.c.l.b16 %v301
    %v341 = vunpack.c.l.b16 %v302
    %v342 = vunpack.c.l.b16 %v303
    %v343 = vunpack.c.l.b16 %v304
    %v344 = vunpack.c.l.b16 %v305
    %v345 = vpack.c.b16 %v330, %v329
    %v346 = vpack.c.b16 %v332, %v331
    %v347 = vpack.c.b16 %v334, %v333
    %v348 = vpack.c.b16 %v336, %v335
    %v349 = vpack.c.b16 %v338, %v337
    %v350 = vpack.c.b16 %v340, %v339
    %v351 = vpack.c.b16 %v342, %v341
    %v352 = vpack.c.b16 %v344, %v343
    %361 = vmatprep.subr.bf16.mxu0 0
    %362 = vmatpush1.bf16.msra.mxu0 %v345
    %363 = vmatprep.subr.bf16.mxu0 0
    %364 = vmatpush1.bf16.msra.mxu0 %v346
    %365 = vmatprep.subr.bf16.mxu0 0
    %366 = vmatpush1.bf16.msra.mxu0 %v347
    %367 = vmatprep.subr.bf16.mxu0 0
    %368 = vmatpush1.bf16.msra.mxu0 %v348
    %369 = vmatprep.subr.bf16.mxu0 0
    %370 = vmatpush1.bf16.msra.mxu0 %v349
    %371 = vmatprep.subr.bf16.mxu0 0
    %372 = vmatpush1.bf16.msra.mxu0 %v350
    %373 = vmatprep.subr.bf16.mxu0 0
    %374 = vmatpush1.bf16.msra.mxu0 %v351
    %375 = vmatprep.subr.bf16.mxu0 0
    %376 = vmatpush1.bf16.msra.mxu0 %v352
    %377 = vmatprep.subr.bf16.mxu0 0
    %378 = vmatpush1.bf16.msra.mxu0 0
    %379 = vmatprep.subr.bf16.mxu0 0
    %380 = vmatpush1.bf16.msra.mxu0 0
    %381 = vmatprep.subr.bf16.mxu0 0
    %382 = vmatpush1.bf16.msra.mxu0 0
    %383 = vmatprep.subr.bf16.mxu0 0
    %384 = vmatpush1.bf16.msra.mxu0 0
    %385 = vmatprep.subr.bf16.mxu0 0
    %386 = vmatpush1.bf16.msra.mxu0 0
    %387 = vmatprep.subr.bf16.mxu0 0
    %388 = vmatpush1.bf16.msra.mxu0 0
    %389 = vmatprep.subr.bf16.mxu0 0
    %390 = vmatpush1.bf16.msra.mxu0 0
    %391 = vmatprep.subr.bf16.mxu0 0
    %392 = vmatpush1.bf16.msra.mxu0 0
    %393 = vmatprep.mubr.bf16.mxu0 0
    %394 = vmatmul.mubr.bf16.gmra.mrb[0].mxu0 %v289
    %v395 = vpop.f32.mrb[0].mxu0
    %v396 = vadd.f32 %v311, %v395
    %v397 = vpop.f32.mrb[0].mxu0
    %v398 = vpop.f32.mrb[0].mxu0
    %v399 = vpop.f32.mrb[0].mxu0
    %400 = vdwg.mxu0
    %401 = vmax.xlane.f32.xlu0 %v396
    %v402 = vpop.xlane.xlu0 %401
    %v403 = vsub.f32 %v396, %v402
    %v404 = vmul.f32 %v403, 1.442695
    %v405 = vpow.pop %v404
    %406 = vadd.xlane.f32.xlu0 %v405
    %v407 = vpop.xlane.xlu0 %406
    %v408 = vmul.f32 %v407, 0.001
    %v409 = vmax.f32 %v405, %v408
    %v410 = vld [vmem:[#allocation8 + $0x4] sm:$0xf]
    %v411 = vld [vmem:[#allocation8 + $0x14] sm:$0xf]
    %v412 = vld [vmem:[#allocation8 + $0x24] sm:$0xf]
    %v413 = vld [vmem:[#allocation8 + $0x34] sm:$0xf]
    %v414 = vld [vmem:[#allocation8 + $0x44] sm:$0xf]
    %v415 = vld [vmem:[#allocation8 + $0x54] sm:$0xf]
    %v416 = vld [vmem:[#allocation8 + $0x64] sm:$0xf]
    %v417 = vld [vmem:[#allocation8 + $0x74] sm:$0xf]
    %v418 = vld [vmem:[#allocation8 + $0x84] sm:$0xf]
    %v419 = vld [vmem:[#allocation8 + $0x94] sm:$0xf]
    %v420 = vld [vmem:[#allocation8 + $0xa4] sm:$0xf]
    %v421 = vld [vmem:[#allocation8 + $0xb4] sm:$0xf]
    %v422 = vld [vmem:[#allocation8 + $0xc4] sm:$0xf]
    %v423 = vld [vmem:[#allocation8 + $0xd4] sm:$0xf]
    %v424 = vld [vmem:[#allocation8 + $0xe4] sm:$0xf]
    %v425 = vld [vmem:[#allocation8 + $0xf4] sm:$0xf]
    %v426 = vld [vmem:[%s6 + $0x1] sm:$0x1]
    %v428 = vlaneseq
    %v429 = vshrl.u32 %v428, 7
    %v430 = vsub.s32 0, %v429
    %v431 = vrot.slane %v426, %v430
    %v449 = vunpack.c.l.b16 %v410
    %v450 = vunpack.c.l.b16 %v411
    %v451 = vunpack.c.l.b16 %v412
    %v452 = vunpack.c.l.b16 %v413
    %v453 = vunpack.c.l.b16 %v414
    %v454 = vunpack.c.l.b16 %v415
    %v455 = vunpack.c.l.b16 %v416
    %v456 = vunpack.c.l.b16 %v417
    %v457 = vunpack.c.l.b16 %v418
    %v458 = vunpack.c.l.b16 %v419
    %v459 = vunpack.c.l.b16 %v420
    %v460 = vunpack.c.l.b16 %v421
    %v461 = vunpack.c.l.b16 %v422
    %v462 = vunpack.c.l.b16 %v423
    %v463 = vunpack.c.l.b16 %v424
    %v464 = vunpack.c.l.b16 %v425
    %v465 = vpack.c.b16 %v450, %v449
    %v466 = vpack.c.b16 %v452, %v451
    %v467 = vpack.c.b16 %v454, %v453
    %v468 = vpack.c.b16 %v456, %v455
    %v469 = vpack.c.b16 %v458, %v457
    %v470 = vpack.c.b16 %v460, %v459
    %v471 = vpack.c.b16 %v462, %v461
    %v472 = vpack.c.b16 %v464, %v463
    %481 = vmatprep.subr.bf16.mxu0 0
    %482 = vmatpush1.bf16.msra.mxu0 %v465
    %483 = vmatprep.subr.bf16.mxu0 0
    %484 = vmatpush1.bf16.msra.mxu0 %v466
    %485 = vmatprep.subr.bf16.mxu0 0
    %486 = vmatpush1.bf16.msra.mxu0 %v467
    %487 = vmatprep.subr.bf16.mxu0 0
    %488 = vmatpush1.bf16.msra.mxu0 %v468
    %489 = vmatprep.subr.bf16.mxu0 0
    %490 = vmatpush1.bf16.msra.mxu0 %v469
    %491 = vmatprep.subr.bf16.mxu0 0
    %492 = vmatpush1.bf16.msra.mxu0 %v470
    %493 = vmatprep.subr.bf16.mxu0 0
    %494 = vmatpush1.bf16.msra.mxu0 %v471
    %495 = vmatprep.subr.bf16.mxu0 0
    %496 = vmatpush1.bf16.msra.mxu0 %v472
    %497 = vmatprep.subr.bf16.mxu0 0
    %498 = vmatpush1.bf16.msra.mxu0 0
    %499 = vmatprep.subr.bf16.mxu0 0
    %500 = vmatpush1.bf16.msra.mxu0 0
    %501 = vmatprep.subr.bf16.mxu0 0
    %502 = vmatpush1.bf16.msra.mxu0 0
    %503 = vmatprep.subr.bf16.mxu0 0
    %504 = vmatpush1.bf16.msra.mxu0 0
    %505 = vmatprep.subr.bf16.mxu0 0
    %506 = vmatpush1.bf16.msra.mxu0 0
    %507 = vmatprep.subr.bf16.mxu0 0
    %508 = vmatpush1.bf16.msra.mxu0 0
    %509 = vmatprep.subr.bf16.mxu0 0
    %510 = vmatpush1.bf16.msra.mxu0 0
    %511 = vmatprep.subr.bf16.mxu0 0
    %512 = vmatpush1.bf16.msra.mxu0 0
    %513 = vmatprep.mubr.bf16.mxu0 0
    %514 = vmatmul.mubr.bf16.gmra.mrb[0].mxu0 %v289
    %v515 = vpop.f32.mrb[0].mxu0
    %v516 = vadd.f32 %v431, %v515
    %v517 = vpop.f32.mrb[0].mxu0
    %v518 = vpop.f32.mrb[0].mxu0
    %v519 = vpop.f32.mrb[0].mxu0
    %520 = vdwg.mxu0
    %521 = vmax.xlane.f32.xlu0 %v516
    %v522 = vpop.xlane.xlu0 %521
    %v523 = vsub.f32 %v516, %v522
    %v524 = vmul.f32 %v523, 1.442695
    %v525 = vpow.pop %v524
    %526 = vadd.xlane.f32.xlu0 %v525
    %v527 = vpop.xlane.xlu0 %526
    %v528 = vmul.f32 %v527, 0.001
    %v529 = vmax.f32 %v525, %v528
    %v530 = vld [vmem:[#allocation8 + $0x8] sm:$0xf]
    %v531 = vld [vmem:[#allocation8 + $0x18] sm:$0xf]
    %v532 = vld [vmem:[#allocation8 + $0x28] sm:$0xf]
    %v533 = vld [vmem:[#allocation8 + $0x38] sm:$0xf]
    %v534 = vld [vmem:[#allocation8 + $0x48] sm:$0xf]
    %v535 = vld [vmem:[#allocation8 + $0x58] sm:$0xf]
    %v536 = vld [vmem:[#allocation8 + $0x68] sm:$0xf]
    %v537 = vld [vmem:[#allocation8 + $0x78] sm:$0xf]
    %v538 = vld [vmem:[#allocation8 + $0x88] sm:$0xf]
    %v539 = vld [vmem:[#allocation8 + $0x98] sm:$0xf]
    %v540 = vld [vmem:[#allocation8 + $0xa8] sm:$0xf]
    %v541 = vld [vmem:[#allocation8 + $0xb8] sm:$0xf]
    %v542 = vld [vmem:[#allocation8 + $0xc8] sm:$0xf]
    %v543 = vld [vmem:[#allocation8 + $0xd8] sm:$0xf]
    %v544 = vld [vmem:[#allocation8 + $0xe8] sm:$0xf]
    %v545 = vld [vmem:[#allocation8 + $0xf8] sm:$0xf]
    %v546 = vld [vmem:[%s6 + $0x2] sm:$0x1]
    %v548 = vlaneseq
    %v549 = vshrl.u32 %v548, 7
    %v550 = vsub.s32 0, %v549
    %v551 = vrot.slane %v546, %v550
    %v569 = vunpack.c.l.b16 %v530
    %v570 = vunpack.c.l.b16 %v531
    %v571 = vunpack.c.l.b16 %v532
    %v572 = vunpack.c.l.b16 %v533
    %v573 = vunpack.c.l.b16 %v534
    %v574 = vunpack.c.l.b16 %v535
    %v575 = vunpack.c.l.b16 %v536
    %v576 = vunpack.c.l.b16 %v537
    %v577 = vunpack.c.l.b16 %v538
    %v578 = vunpack.c.l.b16 %v539
    %v579 = vunpack.c.l.b16 %v540
    %v580 = vunpack.c.l.b16 %v541
    %v581 = vunpack.c.l.b16 %v542
    %v582 = vunpack.c.l.b16 %v543
    %v583 = vunpack.c.l.b16 %v544
    %v584 = vunpack.c.l.b16 %v545
    %v585 = vpack.c.b16 %v570, %v569
    %v586 = vpack.c.b16 %v572, %v571
    %v587 = vpack.c.b16 %v574, %v573
    %v588 = vpack.c.b16 %v576, %v575
    %v589 = vpack.c.b16 %v578, %v577
    %v590 = vpack.c.b16 %v580, %v579
    %v591 = vpack.c.b16 %v582, %v581
    %v592 = vpack.c.b16 %v584, %v583
    %601 = vmatprep.subr.bf16.mxu0 0
    %602 = vmatpush1.bf16.msra.mxu0 %v585
    %603 = vmatprep.subr.bf16.mxu0 0
    %604 = vmatpush1.bf16.msra.mxu0 %v586
    %605 = vmatprep.subr.bf16.mxu0 0
    %606 = vmatpush1.bf16.msra.mxu0 %v587
    %607 = vmatprep.subr.bf16.mxu0 0
    %608 = vmatpush1.bf16.msra.mxu0 %v588
    %609 = vmatprep.subr.bf16.mxu0 0
    %610 = vmatpush1.bf16.msra.mxu0 %v589
    %611 = vmatprep.subr.bf16.mxu0 0
    %612 = vmatpush1.bf16.msra.mxu0 %v590
    %613 = vmatprep.subr.bf16.mxu0 0
    %614 = vmatpush1.bf16.msra.mxu0 %v591
    %615 = vmatprep.subr.bf16.mxu0 0
    %616 = vmatpush1.bf16.msra.mxu0 %v592
    %617 = vmatprep.subr.bf16.mxu0 0
    %618 = vmatpush1.bf16.msra.mxu0 0
    %619 = vmatprep.subr.bf16.mxu0 0
    %620 = vmatpush1.bf16.msra.mxu0 0
    %621 = vmatprep.subr.bf16.mxu0 0
    %622 = vmatpush1.bf16.msra.mxu0 0
    %623 = vmatprep.subr.bf16.mxu0 0
    %624 = vmatpush1.bf16.msra.mxu0 0
    %625 = vmatprep.subr.bf16.mxu0 0
    %626 = vmatpush1.bf16.msra.mxu0 0
    %627 = vmatprep.subr.bf16.mxu0 0
    %628 = vmatpush1.bf16.msra.mxu0 0
    %629 = vmatprep.subr.bf16.mxu0 0
    %630 = vmatpush1.bf16.msra.mxu0 0
    %631 = vmatprep.subr.bf16.mxu0 0
    %632 = vmatpush1.bf16.msra.mxu0 0
    %633 = vmatprep.mubr.bf16.mxu0 0
    %634 = vmatmul.mubr.bf16.gmra.mrb[0].mxu0 %v289
    %v635 = vpop.f32.mrb[0].mxu0
    %v636 = vadd.f32 %v551, %v635
    %v637 = vpop.f32.mrb[0].mxu0
    %v638 = vpop.f32.mrb[0].mxu0
    %v639 = vpop.f32.mrb[0].mxu0
    %640 = vdwg.mxu0
    %641 = vmax.xlane.f32.xlu0 %v636
    %v642 = vpop.xlane.xlu0 %641
    %v643 = vsub.f32 %v636, %v642
    %v644 = vmul.f32 %v643, 1.442695
    %v645 = vpow.pop %v644
    %646 = vadd.xlane.f32.xlu0 %v645
    %v647 = vpop.xlane.xlu0 %646
    %v648 = vmul.f32 %v647, 0.001
    %v649 = vmax.f32 %v645, %v648
    %v650 = vld [vmem:[#allocation8 + $0xc] sm:$0xf]
    %v651 = vld [vmem:[#allocation8 + $0x1c] sm:$0xf]
    %v652 = vld [vmem:[#allocation8 + $0x2c] sm:$0xf]
    %v653 = vld [vmem:[#allocation8 + $0x3c] sm:$0xf]
    %v654 = vld [vmem:[#allocation8 + $0x4c] sm:$0xf]
    %v655 = vld [vmem:[#allocation8 + $0x5c] sm:$0xf]
    %v656 = vld [vmem:[#allocation8 + $0x6c] sm:$0xf]
    %v657 = vld [vmem:[#allocation8 + $0x7c] sm:$0xf]
    %v658 = vld [vmem:[#allocation8 + $0x8c] sm:$0xf]
    %v659 = vld [vmem:[#allocation8 + $0x9c] sm:$0xf]
    %v660 = vld [vmem:[#allocation8 + $0xac] sm:$0xf]
    %v661 = vld [vmem:[#allocation8 + $0xbc] sm:$0xf]
    %v662 = vld [vmem:[#allocation8 + $0xcc] sm:$0xf]
    %v663 = vld [vmem:[#allocation8 + $0xdc] sm:$0xf]
    %v664 = vld [vmem:[#allocation8 + $0xec] sm:$0xf]
    %v665 = vld [vmem:[#allocation8 + $0xfc] sm:$0xf]
    %v666 = vld [vmem:[%s6 + $0x3] sm:$0x1]
    %v668 = vlaneseq
    %v669 = vshrl.u32 %v668, 7
    %v670 = vsub.s32 0, %v669
    %v671 = vrot.slane %v666, %v670
    %v689 = vunpack.c.l.b16 %v650
    %v690 = vunpack.c.l.b16 %v651
    %v691 = vunpack.c.l.b16 %v652
    %v692 = vunpack.c.l.b16 %v653
    %v693 = vunpack.c.l.b16 %v654
    %v694 = vunpack.c.l.b16 %v655
    %v695 = vunpack.c.l.b16 %v656
    %v696 = vunpack.c.l.b16 %v657
    %v697 = vunpack.c.l.b16 %v658
    %v698 = vunpack.c.l.b16 %v659
    %v699 = vunpack.c.l.b16 %v660
    %v700 = vunpack.c.l.b16 %v661
    %v701 = vunpack.c.l.b16 %v662
    %v702 = vunpack.c.l.b16 %v663
    %v703 = vunpack.c.l.b16 %v664
    %v704 = vunpack.c.l.b16 %v665
    %v705 = vpack.c.b16 %v690, %v689
    %v706 = vpack.c.b16 %v692, %v691
    %v707 = vpack.c.b16 %v694, %v693
    %v708 = vpack.c.b16 %v696, %v695
    %v709 = vpack.c.b16 %v698, %v697
    %v710 = vpack.c.b16 %v700, %v699
    %v711 = vpack.c.b16 %v702, %v701
    %v712 = vpack.c.b16 %v704, %v703
    %721 = vmatprep.subr.bf16.mxu0 0
    %722 = vmatpush1.bf16.msra.mxu0 %v705
    %723 = vmatprep.subr.bf16.mxu0 0
    %724 = vmatpush1.bf16.msra.mxu0 %v706
    %725 = vmatprep.subr.bf16.mxu0 0
    %726 = vmatpush1.bf16.msra.mxu0 %v707
    %727 = vmatprep.subr.bf16.mxu0 0
    %728 = vmatpush1.bf16.msra.mxu0 %v708
    %729 = vmatprep.subr.bf16.mxu0 0
    %730 = vmatpush1.bf16.msra.mxu0 %v709
    %731 = vmatprep.subr.bf16.mxu0 0
    %732 = vmatpush1.bf16.msra.mxu0 %v710
    %733 = vmatprep.subr.bf16.mxu0 0
    %734 = vmatpush1.bf16.msra.mxu0 %v711
    %735 = vmatprep.subr.bf16.mxu0 0
    %736 = vmatpush1.bf16.msra.mxu0 %v712
    %737 = vmatprep.subr.bf16.mxu0 0
    %738 = vmatpush1.bf16.msra.mxu0 0
    %739 = vmatprep.subr.bf16.mxu0 0
    %740 = vmatpush1.bf16.msra.mxu0 0
    %741 = vmatprep.subr.bf16.mxu0 0
    %742 = vmatpush1.bf16.msra.mxu0 0
    %743 = vmatprep.subr.bf16.mxu0 0
    %744 = vmatpush1.bf16.msra.mxu0 0
    %745 = vmatprep.subr.bf16.mxu0 0
    %746 = vmatpush1.bf16.msra.mxu0 0
    %747 = vmatprep.subr.bf16.mxu0 0
    %748 = vmatpush1.bf16.msra.mxu0 0
    %749 = vmatprep.subr.bf16.mxu0 0
    %750 = vmatpush1.bf16.msra.mxu0 0
    %751 = vmatprep.subr.bf16.mxu0 0
    %752 = vmatpush1.bf16.msra.mxu0 0
    %753 = vmatprep.mubr.bf16.mxu0 0
    %754 = vmatmul.mubr.bf16.gmra.mrb[0].mxu0 %v289
    %v755 = vpop.f32.mrb[0].mxu0
    %v756 = vadd.f32 %v671, %v755
    %v757 = vpop.f32.mrb[0].mxu0
    %v758 = vpop.f32.mrb[0].mxu0
    %v759 = vpop.f32.mrb[0].mxu0
    %760 = vdwg.mxu0
    %761 = vmax.xlane.f32.xlu0 %v756
    %v762 = vpop.xlane.xlu0 %761
    %v763 = vsub.f32 %v756, %v762
    %v764 = vmul.f32 %v763, 1.442695
    %v765 = vpow.pop %v764
    %766 = vadd.xlane.f32.xlu0 %v765
    %v767 = vpop.xlane.xlu0 %766
    %v768 = vmul.f32 %v767, 0.001
    %v769 = vmax.f32 %v765, %v768
    %v770 = vld [vmem:[#allocation10] sm:$0xff]
    %v771 = vld [vmem:[#allocation10 + $0x8] sm:$0xff]
    %v772 = vld [vmem:[#allocation10 + $0x10] sm:$0xff]
    %v773 = vld [vmem:[#allocation10 + $0x18] sm:$0xff]
    %v774 = vld [vmem:[#allocation10 + $0x20] sm:$0xff]
    %v775 = vld [vmem:[#allocation10 + $0x28] sm:$0xff]
    %v776 = vld [vmem:[#allocation10 + $0x30] sm:$0xff]
    %v777 = vld [vmem:[#allocation10 + $0x38] sm:$0xff]
    %v778 = vld [vmem:[#allocation10 + $0x40] sm:$0xff]
    %v779 = vld [vmem:[#allocation10 + $0x48] sm:$0xff]
    %v780 = vld [vmem:[#allocation10 + $0x50] sm:$0xff]
    %v781 = vld [vmem:[#allocation10 + $0x58] sm:$0xff]
    %v782 = vld [vmem:[#allocation10 + $0x60] sm:$0xff]
    %v783 = vld [vmem:[#allocation10 + $0x68] sm:$0xff]
    %v784 = vld [vmem:[#allocation10 + $0x70] sm:$0xff]
    %v785 = vld [vmem:[#allocation10 + $0x78] sm:$0xff]
    %v786 = vld [vmem:[#allocation10 + $0x80] sm:$0xff]
    %v787 = vld [vmem:[#allocation10 + $0x88] sm:$0xff]
    %v788 = vld [vmem:[#allocation10 + $0x90] sm:$0xff]
    %v789 = vld [vmem:[#allocation10 + $0x98] sm:$0xff]
    %v790 = vld [vmem:[#allocation10 + $0xa0] sm:$0xff]
    %v791 = vld [vmem:[#allocation10 + $0xa8] sm:$0xff]
    %v792 = vld [vmem:[#allocation10 + $0xb0] sm:$0xff]
    %v793 = vld [vmem:[#allocation10 + $0xb8] sm:$0xff]
    %v794 = vld [vmem:[#allocation10 + $0xc0] sm:$0xff]
    %v795 = vld [vmem:[#allocation10 + $0xc8] sm:$0xff]
    %v796 = vld [vmem:[#allocation10 + $0xd0] sm:$0xff]
    %v797 = vld [vmem:[#allocation10 + $0xd8] sm:$0xff]
    %v798 = vld [vmem:[#allocation10 + $0xe0] sm:$0xff]
    %v799 = vld [vmem:[#allocation10 + $0xe8] sm:$0xff]
    %v800 = vld [vmem:[#allocation10 + $0xf0] sm:$0xff]
    %v801 = vld [vmem:[#allocation10 + $0xf8] sm:$0xff]
    %v802 = vld [vmem:[#allocation10 + $0x100] sm:$0xff]
    %v803 = vld [vmem:[#allocation10 + $0x108] sm:$0xff]
    %v804 = vld [vmem:[#allocation10 + $0x110] sm:$0xff]
    %v805 = vld [vmem:[#allocation10 + $0x118] sm:$0xff]
    %v806 = vld [vmem:[#allocation10 + $0x120] sm:$0xff]
    %v807 = vld [vmem:[#allocation10 + $0x128] sm:$0xff]
    %v808 = vld [vmem:[#allocation10 + $0x130] sm:$0xff]
    %v809 = vld [vmem:[#allocation10 + $0x138] sm:$0xff]
    %v810 = vld [vmem:[#allocation10 + $0x140] sm:$0xff]
    %v811 = vld [vmem:[#allocation10 + $0x148] sm:$0xff]
    %v812 = vld [vmem:[#allocation10 + $0x150] sm:$0xff]
    %v813 = vld [vmem:[#allocation10 + $0x158] sm:$0xff]
    %v814 = vld [vmem:[#allocation10 + $0x160] sm:$0xff]
    %v815 = vld [vmem:[#allocation10 + $0x168] sm:$0xff]
    %v816 = vld [vmem:[#allocation10 + $0x170] sm:$0xff]
    %v817 = vld [vmem:[#allocation10 + $0x178] sm:$0xff]
    %v818 = vld [vmem:[#allocation10 + $0x180] sm:$0xff]
    %v819 = vld [vmem:[#allocation10 + $0x188] sm:$0xff]
    %v820 = vld [vmem:[#allocation10 + $0x190] sm:$0xff]
    %v821 = vld [vmem:[#allocation10 + $0x198] sm:$0xff]
    %v822 = vld [vmem:[#allocation10 + $0x1a0] sm:$0xff]
    %v823 = vld [vmem:[#allocation10 + $0x1a8] sm:$0xff]
    %v824 = vld [vmem:[#allocation10 + $0x1b0] sm:$0xff]
    %v825 = vld [vmem:[#allocation10 + $0x1b8] sm:$0xff]
    %v826 = vld [vmem:[#allocation10 + $0x1c0] sm:$0xff]
    %v827 = vld [vmem:[#allocation10 + $0x1c8] sm:$0xff]
    %v828 = vld [vmem:[#allocation10 + $0x1d0] sm:$0xff]
    %v829 = vld [vmem:[#allocation10 + $0x1d8] sm:$0xff]
    %v830 = vld [vmem:[#allocation10 + $0x1e0] sm:$0xff]
    %v831 = vld [vmem:[#allocation10 + $0x1e8] sm:$0xff]
    %v832 = vld [vmem:[#allocation10 + $0x1f0] sm:$0xff]
    %v833 = vld [vmem:[#allocation10 + $0x1f8] sm:$0xff]
    %834 = vmatprep.subr.mxu0 0.0
    %835 = vmatpush1.msra.mxu0 %v770
    %836 = vmatprep.subr.mxu0 0.0
    %837 = vmatpush1.msra.mxu0 %v771
    %838 = vmatprep.subr.mxu0 0.0
    %839 = vmatpush1.msra.mxu0 %v772
    %840 = vmatprep.subr.mxu0 0.0
    %841 = vmatpush1.msra.mxu0 %v773
    %842 = vmatprep.subr.mxu0 0.0
    %843 = vmatpush1.msra.mxu0 %v774
    %844 = vmatprep.subr.mxu0 0.0
    %845 = vmatpush1.msra.mxu0 %v775
    %846 = vmatprep.subr.mxu0 0.0
    %847 = vmatpush1.msra.mxu0 %v776
    %848 = vmatprep.subr.mxu0 0.0
    %849 = vmatpush1.msra.mxu0 %v777
    %850 = vmatprep.subr.mxu0 0.0
    %851 = vmatpush1.msra.mxu0 %v778
    %852 = vmatprep.subr.mxu0 0.0
    %853 = vmatpush1.msra.mxu0 %v779
    %854 = vmatprep.subr.mxu0 0.0
    %855 = vmatpush1.msra.mxu0 %v780
    %856 = vmatprep.subr.mxu0 0.0
    %857 = vmatpush1.msra.mxu0 %v781
    %858 = vmatprep.subr.mxu0 0.0
    %859 = vmatpush1.msra.mxu0 %v782
    %860 = vmatprep.subr.mxu0 0.0
    %861 = vmatpush1.msra.mxu0 %v783
    %862 = vmatprep.subr.mxu0 0.0
    %863 = vmatpush1.msra.mxu0 %v784
    %864 = vmatprep.subr.mxu0 0.0
    %865 = vmatpush1.msra.mxu0 %v785
    %866 = vmatprep.subr.mxu0 0.0
    %867 = vmatpush1.msra.mxu0 %v786
    %868 = vmatprep.subr.mxu0 0.0
    %869 = vmatpush1.msra.mxu0 %v787
    %870 = vmatprep.subr.mxu0 0.0
    %871 = vmatpush1.msra.mxu0 %v788
    %872 = vmatprep.subr.mxu0 0.0
    %873 = vmatpush1.msra.mxu0 %v789
    %874 = vmatprep.subr.mxu0 0.0
    %875 = vmatpush1.msra.mxu0 %v790
    %876 = vmatprep.subr.mxu0 0.0
    %877 = vmatpush1.msra.mxu0 %v791
    %878 = vmatprep.subr.mxu0 0.0
    %879 = vmatpush1.msra.mxu0 %v792
    %880 = vmatprep.subr.mxu0 0.0
    %881 = vmatpush1.msra.mxu0 %v793
    %882 = vmatprep.subr.mxu0 0.0
    %883 = vmatpush1.msra.mxu0 %v794
    %884 = vmatprep.subr.mxu0 0.0
    %885 = vmatpush1.msra.mxu0 %v795
    %886 = vmatprep.subr.mxu0 0.0
    %887 = vmatpush1.msra.mxu0 %v796
    %888 = vmatprep.subr.mxu0 0.0
    %889 = vmatpush1.msra.mxu0 %v797
    %890 = vmatprep.subr.mxu0 0.0
    %891 = vmatpush1.msra.mxu0 %v798
    %892 = vmatprep.subr.mxu0 0.0
    %893 = vmatpush1.msra.mxu0 %v799
    %894 = vmatprep.subr.mxu0 0.0
    %895 = vmatpush1.msra.mxu0 %v800
    %896 = vmatprep.subr.mxu0 0.0
    %897 = vmatpush1.msra.mxu0 %v801
    %898 = vmatprep.mubr.f32.mxu0 %v529
    %899 = vmatmul.mubr.f32.gmra.mrb[0].mxu0 %v409
    %v900 = vpop.f32.mrb[0].mxu0
    %v901 = vadd.f32 0.0, %v900
    %v902 = vpop.f32.mrb[0].mxu0
    %903 = vdwg.mxu0
    %904 = vmatprep.subr.mxu0 0.0
    %905 = vmatpush1.msra.mxu0 %v802
    %906 = vmatprep.subr.mxu0 0.0
    %907 = vmatpush1.msra.mxu0 %v803
    %908 = vmatprep.subr.mxu0 0.0
    %909 = vmatpush1.msra.mxu0 %v804
    %910 = vmatprep.subr.mxu0 0.0
    %911 = vmatpush1.msra.mxu0 %v805
    %912 = vmatprep.subr.mxu0 0.0
    %913 = vmatpush1.msra.mxu0 %v806
    %914 = vmatprep.subr.mxu0 0.0
    %915 = vmatpush1.msra.mxu0 %v807
    %916 = vmatprep.subr.mxu0 0.0
    %917 = vmatpush1.msra.mxu0 %v808
    %918 = vmatprep.subr.mxu0 0.0
    %919 = vmatpush1.msra.mxu0 %v809
    %920 = vmatprep.subr.mxu0 0.0
    %921 = vmatpush1.msra.mxu0 %v810
    %922 = vmatprep.subr.mxu0 0.0
    %923 = vmatpush1.msra.mxu0 %v811
    %924 = vmatprep.subr.mxu0 0.0
    %925 = vmatpush1.msra.mxu0 %v812
    %926 = vmatprep.subr.mxu0 0.0
    %927 = vmatpush1.msra.mxu0 %v813
    %928 = vmatprep.subr.mxu0 0.0
    %929 = vmatpush1.msra.mxu0 %v814
    %930 = vmatprep.subr.mxu0 0.0
    %931 = vmatpush1.msra.mxu0 %v815
    %932 = vmatprep.subr.mxu0 0.0
    %933 = vmatpush1.msra.mxu0 %v816
    %934 = vmatprep.subr.mxu0 0.0
    %935 = vmatpush1.msra.mxu0 %v817
    %936 = vmatprep.subr.mxu0 0.0
    %937 = vmatpush1.msra.mxu0 %v818
    %938 = vmatprep.subr.mxu0 0.0
    %939 = vmatpush1.msra.mxu0 %v819
    %940 = vmatprep.subr.mxu0 0.0
    %941 = vmatpush1.msra.mxu0 %v820
    %942 = vmatprep.subr.mxu0 0.0
    %943 = vmatpush1.msra.mxu0 %v821
    %944 = vmatprep.subr.mxu0 0.0
    %945 = vmatpush1.msra.mxu0 %v822
    %946 = vmatprep.subr.mxu0 0.0
    %947 = vmatpush1.msra.mxu0 %v823
    %948 = vmatprep.subr.mxu0 0.0
    %949 = vmatpush1.msra.mxu0 %v824
    %950 = vmatprep.subr.mxu0 0.0
    %951 = vmatpush1.msra.mxu0 %v825
    %952 = vmatprep.subr.mxu0 0.0
    %953 = vmatpush1.msra.mxu0 %v826
    %954 = vmatprep.subr.mxu0 0.0
    %955 = vmatpush1.msra.mxu0 %v827
    %956 = vmatprep.subr.mxu0 0.0
    %957 = vmatpush1.msra.mxu0 %v828
    %958 = vmatprep.subr.mxu0 0.0
    %959 = vmatpush1.msra.mxu0 %v829
    %960 = vmatprep.subr.mxu0 0.0
    %961 = vmatpush1.msra.mxu0 %v830
    %962 = vmatprep.subr.mxu0 0.0
    %963 = vmatpush1.msra.mxu0 %v831
    %964 = vmatprep.subr.mxu0 0.0
    %965 = vmatpush1.msra.mxu0 %v832
    %966 = vmatprep.subr.mxu0 0.0
    %967 = vmatpush1.msra.mxu0 %v833
    %968 = vmatprep.mubr.f32.mxu0 %v769
    %969 = vmatmul.mubr.f32.gmra.mrb[0].mxu0 %v649
    %v970 = vpop.f32.mrb[0].mxu0
    %v971 = vadd.f32 %v901, %v970
    %v972 = vpop.f32.mrb[0].mxu0
    %973 = vdwg.mxu0
    %v974 = vld [vmem:[#allocation11] sm:$0xff]
    %v975 = vld [vmem:[#allocation11 + $0x8] sm:$0xff]
    %v976 = vld [vmem:[#allocation11 + $0x10] sm:$0xff]
    %v977 = vld [vmem:[#allocation11 + $0x18] sm:$0xff]
    %v978 = vld [vmem:[#allocation11 + $0x20] sm:$0xff]
    %v979 = vld [vmem:[#allocation11 + $0x28] sm:$0xff]
    %v980 = vld [vmem:[#allocation11 + $0x30] sm:$0xff]
    %v981 = vld [vmem:[#allocation11 + $0x38] sm:$0xff]
    %v982 = vld [vmem:[#allocation11 + $0x40] sm:$0xff]
    %v983 = vld [vmem:[#allocation11 + $0x48] sm:$0xff]
    %v984 = vld [vmem:[#allocation11 + $0x50] sm:$0xff]
    %v985 = vld [vmem:[#allocation11 + $0x58] sm:$0xff]
    %v986 = vld [vmem:[#allocation11 + $0x60] sm:$0xff]
    %v987 = vld [vmem:[#allocation11 + $0x68] sm:$0xff]
    %v988 = vld [vmem:[#allocation11 + $0x70] sm:$0xff]
    %v989 = vld [vmem:[#allocation11 + $0x78] sm:$0xff]
    %v990 = vld [vmem:[#allocation11 + $0x80] sm:$0xff]
    %v991 = vld [vmem:[#allocation11 + $0x88] sm:$0xff]
    %v992 = vld [vmem:[#allocation11 + $0x90] sm:$0xff]
    %v993 = vld [vmem:[#allocation11 + $0x98] sm:$0xff]
    %v994 = vld [vmem:[#allocation11 + $0xa0] sm:$0xff]
    %v995 = vld [vmem:[#allocation11 + $0xa8] sm:$0xff]
    %v996 = vld [vmem:[#allocation11 + $0xb0] sm:$0xff]
    %v997 = vld [vmem:[#allocation11 + $0xb8] sm:$0xff]
    %v998 = vld [vmem:[#allocation11 + $0xc0] sm:$0xff]
    %v999 = vld [vmem:[#allocation11 + $0xc8] sm:$0xff]
    %v1000 = vld [vmem:[#allocation11 + $0xd0] sm:$0xff]
    %v1001 = vld [vmem:[#allocation11 + $0xd8] sm:$0xff]
    %v1002 = vld [vmem:[#allocation11 + $0xe0] sm:$0xff]
    %v1003 = vld [vmem:[#allocation11 + $0xe8] sm:$0xff]
    %v1004 = vld [vmem:[#allocation11 + $0xf0] sm:$0xff]
    %v1005 = vld [vmem:[#allocation11 + $0xf8] sm:$0xff]
    %v1006 = vld [vmem:[#allocation11 + $0x100] sm:$0xff]
    %v1007 = vld [vmem:[#allocation11 + $0x108] sm:$0xff]
    %v1008 = vld [vmem:[#allocation11 + $0x110] sm:$0xff]
    %v1009 = vld [vmem:[#allocation11 + $0x118] sm:$0xff]
    %v1010 = vld [vmem:[#allocation11 + $0x120] sm:$0xff]
    %v1011 = vld [vmem:[#allocation11 + $0x128] sm:$0xff]
    %v1012 = vld [vmem:[#allocation11 + $0x130] sm:$0xff]
    %v1013 = vld [vmem:[#allocation11 + $0x138] sm:$0xff]
    %v1014 = vld [vmem:[#allocation11 + $0x140] sm:$0xff]
    %v1015 = vld [vmem:[#allocation11 + $0x148] sm:$0xff]
    %v1016 = vld [vmem:[#allocation11 + $0x150] sm:$0xff]
    %v1017 = vld [vmem:[#allocation11 + $0x158] sm:$0xff]
    %v1018 = vld [vmem:[#allocation11 + $0x160] sm:$0xff]
    %v1019 = vld [vmem:[#allocation11 + $0x168] sm:$0xff]
    %v1020 = vld [vmem:[#allocation11 + $0x170] sm:$0xff]
    %v1021 = vld [vmem:[#allocation11 + $0x178] sm:$0xff]
    %v1022 = vld [vmem:[#allocation11 + $0x180] sm:$0xff]
    %v1023 = vld [vmem:[#allocation11 + $0x188] sm:$0xff]
    %v1024 = vld [vmem:[#allocation11 + $0x190] sm:$0xff]
    %v1025 = vld [vmem:[#allocation11 + $0x198] sm:$0xff]
    %v1026 = vld [vmem:[#allocation11 + $0x1a0] sm:$0xff]
    %v1027 = vld [vmem:[#allocation11 + $0x1a8] sm:$0xff]
    %v1028 = vld [vmem:[#allocation11 + $0x1b0] sm:$0xff]
    %v1029 = vld [vmem:[#allocation11 + $0x1b8] sm:$0xff]
    %v1030 = vld [vmem:[#allocation11 + $0x1c0] sm:$0xff]
    %v1031 = vld [vmem:[#allocation11 + $0x1c8] sm:$0xff]
    %v1032 = vld [vmem:[#allocation11 + $0x1d0] sm:$0xff]
    %v1033 = vld [vmem:[#allocation11 + $0x1d8] sm:$0xff]
    %v1034 = vld [vmem:[#allocation11 + $0x1e0] sm:$0xff]
    %v1035 = vld [vmem:[#allocation11 + $0x1e8] sm:$0xff]
    %v1036 = vld [vmem:[#allocation11 + $0x1f0] sm:$0xff]
    %v1037 = vld [vmem:[#allocation11 + $0x1f8] sm:$0xff]
    %1038 = vmatprep.subr.mxu0 0.0
    %1039 = vmatpush1.msra.mxu0 %v974
    %1040 = vmatprep.subr.mxu0 0.0
    %1041 = vmatpush1.msra.mxu0 %v975
    %1042 = vmatprep.subr.mxu0 0.0
    %1043 = vmatpush1.msra.mxu0 %v976
    %1044 = vmatprep.subr.mxu0 0.0
    %1045 = vmatpush1.msra.mxu0 %v977
    %1046 = vmatprep.subr.mxu0 0.0
    %1047 = vmatpush1.msra.mxu0 %v978
    %1048 = vmatprep.subr.mxu0 0.0
    %1049 = vmatpush1.msra.mxu0 %v979
    %1050 = vmatprep.subr.mxu0 0.0
    %1051 = vmatpush1.msra.mxu0 %v980
    %1052 = vmatprep.subr.mxu0 0.0
    %1053 = vmatpush1.msra.mxu0 %v981
    %1054 = vmatprep.subr.mxu0 0.0
    %1055 = vmatpush1.msra.mxu0 %v982
    %1056 = vmatprep.subr.mxu0 0.0
    %1057 = vmatpush1.msra.mxu0 %v983
    %1058 = vmatprep.subr.mxu0 0.0
    %1059 = vmatpush1.msra.mxu0 %v984
    %1060 = vmatprep.subr.mxu0 0.0
    %1061 = vmatpush1.msra.mxu0 %v985
    %1062 = vmatprep.subr.mxu0 0.0
    %1063 = vmatpush1.msra.mxu0 %v986
    %1064 = vmatprep.subr.mxu0 0.0
    %1065 = vmatpush1.msra.mxu0 %v987
    %1066 = vmatprep.subr.mxu0 0.0
    %1067 = vmatpush1.msra.mxu0 %v988
    %1068 = vmatprep.subr.mxu0 0.0
    %1069 = vmatpush1.msra.mxu0 %v989
    %1070 = vmatprep.subr.mxu0 0.0
    %1071 = vmatpush1.msra.mxu0 %v990
    %1072 = vmatprep.subr.mxu0 0.0
    %1073 = vmatpush1.msra.mxu0 %v991
    %1074 = vmatprep.subr.mxu0 0.0
    %1075 = vmatpush1.msra.mxu0 %v992
    %1076 = vmatprep.subr.mxu0 0.0
    %1077 = vmatpush1.msra.mxu0 %v993
    %1078 = vmatprep.subr.mxu0 0.0
    %1079 = vmatpush1.msra.mxu0 %v994
    %1080 = vmatprep.subr.mxu0 0.0
    %1081 = vmatpush1.msra.mxu0 %v995
    %1082 = vmatprep.subr.mxu0 0.0
    %1083 = vmatpush1.msra.mxu0 %v996
    %1084 = vmatprep.subr.mxu0 0.0
    %1085 = vmatpush1.msra.mxu0 %v997
    %1086 = vmatprep.subr.mxu0 0.0
    %1087 = vmatpush1.msra.mxu0 %v998
    %1088 = vmatprep.subr.mxu0 0.0
    %1089 = vmatpush1.msra.mxu0 %v999
    %1090 = vmatprep.subr.mxu0 0.0
    %1091 = vmatpush1.msra.mxu0 %v1000
    %1092 = vmatprep.subr.mxu0 0.0
    %1093 = vmatpush1.msra.mxu0 %v1001
    %1094 = vmatprep.subr.mxu0 0.0
    %1095 = vmatpush1.msra.mxu0 %v1002
    %1096 = vmatprep.subr.mxu0 0.0
    %1097 = vmatpush1.msra.mxu0 %v1003
    %1098 = vmatprep.subr.mxu0 0.0
    %1099 = vmatpush1.msra.mxu0 %v1004
    %1100 = vmatprep.subr.mxu0 0.0
    %1101 = vmatpush1.msra.mxu0 %v1005
    %1102 = vmatprep.mubr.f32.mxu0 %v525
    %1103 = vmatmul.mubr.f32.gmra.mrb[0].mxu0 %v405
    %v1104 = vpop.f32.mrb[0].mxu0
    %v1105 = vadd.f32 0.0, %v1104
    %v1106 = vpop.f32.mrb[0].mxu0
    %1107 = vdwg.mxu0
    %1108 = vmatprep.subr.mxu0 0.0
    %1109 = vmatpush1.msra.mxu0 %v1006
    %1110 = vmatprep.subr.mxu0 0.0
    %1111 = vmatpush1.msra.mxu0 %v1007
    %1112 = vmatprep.subr.mxu0 0.0
    %1113 = vmatpush1.msra.mxu0 %v1008
    %1114 = vmatprep.subr.mxu0 0.0
    %1115 = vmatpush1.msra.mxu0 %v1009
    %1116 = vmatprep.subr.mxu0 0.0
    %1117 = vmatpush1.msra.mxu0 %v1010
    %1118 = vmatprep.subr.mxu0 0.0
    %1119 = vmatpush1.msra.mxu0 %v1011
    %1120 = vmatprep.subr.mxu0 0.0
    %1121 = vmatpush1.msra.mxu0 %v1012
    %1122 = vmatprep.subr.mxu0 0.0
    %1123 = vmatpush1.msra.mxu0 %v1013
    %1124 = vmatprep.subr.mxu0 0.0
    %1125 = vmatpush1.msra.mxu0 %v1014
    %1126 = vmatprep.subr.mxu0 0.0
    %1127 = vmatpush1.msra.mxu0 %v1015
    %1128 = vmatprep.subr.mxu0 0.0
    %1129 = vmatpush1.msra.mxu0 %v1016
    %1130 = vmatprep.subr.mxu0 0.0
    %1131 = vmatpush1.msra.mxu0 %v1017
    %1132 = vmatprep.subr.mxu0 0.0
    %1133 = vmatpush1.msra.mxu0 %v1018
    %1134 = vmatprep.subr.mxu0 0.0
    %1135 = vmatpush1.msra.mxu0 %v1019
    %1136 = vmatprep.subr.mxu0 0.0
    %1137 = vmatpush1.msra.mxu0 %v1020
    %1138 = vmatprep.subr.mxu0 0.0
    %1139 = vmatpush1.msra.mxu0 %v1021
    %1140 = vmatprep.subr.mxu0 0.0
    %1141 = vmatpush1.msra.mxu0 %v1022
    %1142 = vmatprep.subr.mxu0 0.0
    %1143 = vmatpush1.msra.mxu0 %v1023
    %1144 = vmatprep.subr.mxu0 0.0
    %1145 = vmatpush1.msra.mxu0 %v1024
    %1146 = vmatprep.subr.mxu0 0.0
    %1147 = vmatpush1.msra.mxu0 %v1025
    %1148 = vmatprep.subr.mxu0 0.0
    %1149 = vmatpush1.msra.mxu0 %v1026
    %1150 = vmatprep.subr.mxu0 0.0
    %1151 = vmatpush1.msra.mxu0 %v1027
    %1152 = vmatprep.subr.mxu0 0.0
    %1153 = vmatpush1.msra.mxu0 %v1028
    %1154 = vmatprep.subr.mxu0 0.0
    %1155 = vmatpush1.msra.mxu0 %v1029
    %1156 = vmatprep.subr.mxu0 0.0
    %1157 = vmatpush1.msra.mxu0 %v1030
    %1158 = vmatprep.subr.mxu0 0.0
    %1159 = vmatpush1.msra.mxu0 %v1031
    %1160 = vmatprep.subr.mxu0 0.0
    %1161 = vmatpush1.msra.mxu0 %v1032
    %1162 = vmatprep.subr.mxu0 0.0
    %1163 = vmatpush1.msra.mxu0 %v1033
    %1164 = vmatprep.subr.mxu0 0.0
    %1165 = vmatpush1.msra.mxu0 %v1034
    %1166 = vmatprep.subr.mxu0 0.0
    %1167 = vmatpush1.msra.mxu0 %v1035
    %1168 = vmatprep.subr.mxu0 0.0
    %1169 = vmatpush1.msra.mxu0 %v1036
    %1170 = vmatprep.subr.mxu0 0.0
    %1171 = vmatpush1.msra.mxu0 %v1037
    %1172 = vmatprep.mubr.f32.mxu0 %v765
    %1173 = vmatmul.mubr.f32.gmra.mrb[0].mxu0 %v645
    %v1174 = vpop.f32.mrb[0].mxu0
    %v1175 = vadd.f32 %v1105, %v1174
    %v1176 = vpop.f32.mrb[0].mxu0
    %1177 = vdwg.mxu0
    %v1178 = vmax.f32 %v1175, 0.5
    %v1179 = vrcp.pop %v1178
    %v1180 = vmul.f32 %v971, %v1179
    %1181 = vst [vmem:[#allocation13] sm:$0xff] %v1180
    // Predicated region
    $region62: #{tpu_custom_call.1} parent=1 // pred_check
      _
    $region63: #{tpu_custom_call.1} parent=1 // pred_check_branch
      %1183 = sbr.rel (0) target = $region65
    $region64: #{tpu_custom_call.1} parent=1 // pred_region
      %s1185 = ssub.s32 128, 128
      %1186 = vsyncadd [#allocation4], %s1185
      %s1188 = sshll.u32 [#allocation13], 4
      %s1189 = int_to_ptr.vmem [resolvable:$true] %s1188
      %1191 = dma.vmem_to_hbm [thread:$0]  %s1189, 128, %s9, [#allocation4]
    $region65: #{tpu_custom_call.1} parent=1 // pred_fallthru
      _
    // Predicated region
    $region66: #{tpu_custom_call.1} parent=1 // pred_check
      _
    $region67: #{tpu_custom_call.1} parent=1 // pred_check_branch
      %1193 = sbr.rel (0) target = $region69
    $region68: #{tpu_custom_call.1} parent=1 // pred_region
      %1194 = dma.done [#allocation4], 128
    $region69: #{tpu_custom_call.1} parent=1 // pred_fallthru
      _
    %1195 = vsyncpa [#allocation3], 1
    %1196 = vsyncpa [#allocation6], 1
    %1197 = vsyncpa [#allocation9], 1
    %1198 = vsyncpa [#allocation12], 1
    %1199 = vsyncpa [#allocation4], 1

</llo_original>
